<compile_context>
chip_gen: v7x
topology: tpu7x:2x2x1
jax: 0.10.0
libtpu: 0.0.40
codegen_flags: <defaults>
</compile_context>

<pallas_src>
import math
import functools

import numpy as np
import jax
import jax.numpy as jnp
from jax import lax
from jax.experimental import pallas as pl
from jax.experimental.pallas import tpu as pltpu

# ----- constants from flif_neuron.__init__ -----
ALPHA = 0.2
DT = 1.0
THRESHOLD = -50.0
V_INIT = -70.0
VL = -70.0
V_RESET = -70.0
GL = 0.025
CM = 0.5
GAMMA_2MA = math.gamma(2.0 - ALPHA)

# Folded update: V_new = V_old + coef * (-gl*(V_old-VL) + I) - memory_V
#   N == 1 :  coef = dt / Cm            (classic LIF Euler step, memory_V == 0)
#   N >= 2 :  coef = dt^a * G(2-a) / Cm (fractional step)
C_LIF = DT / CM
C_FRAC = (DT ** ALPHA) * GAMMA_2MA / CM


def _round_up(x, m):
    return -(-x // m) * m


# ----------------------------- Pallas kernel -----------------------------
def _flif_block_kernel(i_ref, w_ref, spike_ref, vout_ref, v_scr, dtr_scr, *,
                       t_tile, w_intra):
    """One grid point = one (lane tile, time block of t_tile steps).

    i_ref     : (Tt, Lt)        input currents for this time block / lane tile
    w_ref     : (Tt, H_rows)    history-weight rows for this time block
    spike_ref : (Tt, Lt)        output spikes
    vout_ref  : (Tt, Lt)        output membrane voltages
    v_scr     : (1, Lt)         VMEM-resident V carried across time blocks
    dtr_scr   : (H_rows, Lt)    VMEM-resident delta_trace (row n = delta of global step n)

    CORRECTNESS INVARIANT: the time axis must stay the trailing ("arbitrary", innermost)
    grid axis so that, for every lane tile, time blocks run in order and tb == 0
    re-initializes the resident scratch.
    """
    tb = pl.program_id(1)                       # time-block index
    base = pl.multiple_of(tb * t_tile, t_tile)  # 8-aligned row offset into dtr_scr
    first_blk = tb == 0

    @pl.when(first_blk)
    def _init():
        dtr_scr[...] = jnp.zeros(dtr_scr.shape, dtr_scr.dtype)
        v_scr[...] = jnp.full(v_scr.shape, V_INIT, v_scr.dtype)

    # "Old history" part of memory_V for every step of this block in one MXU matmul:
    #   mem_old[s, :] = sum_j W[base+s, j] * delta_trace[j, :]
    # Rows j >= base are still zero at this point, so only previously written history
    # contributes; the intra-block rows are added below with exact f32 VPU FMAs.
    mem_old = jnp.dot(w_ref[...], dtr_scr[...],
                      precision=lax.Precision.HIGHEST,
                      preferred_element_type=jnp.float32)          # (Tt, Lt)

    I_blk = i_ref[...]                                             # (Tt, Lt)
    V = v_scr[...]                                                 # (1, Lt)

    deltas, spikes, vouts = [], [], []
    for s in range(t_tile):                     # fully unrolled recurrence
        I_s = I_blk[s:s + 1, :]
        drive = I_s - GL * (V - VL)
        mem = mem_old[s:s + 1, :]
        for r in range(s):                      # intra-block history, scalar constants
            w = w_intra[s][r]
            if w != 0.0:
                mem = mem + w * deltas[r]
        if s == 1:
            # global step 1 (only possible in the first block) uses the LIF coefficient
            coef = jnp.where(first_blk, C_LIF, C_FRAC)
        else:
            coef = C_FRAC
        V_upd = V + coef * drive - mem
        spike = (V - THRESHOLD > 0).astype(jnp.float32)            # uses V_old, as in torch
        V_new = V_upd - spike * (V_upd - V_RESET)
        if s == 0:
            # global step 0: constant init (spike is already 0 since V == V_INIT there)
            V_new = jnp.where(first_blk, jnp.full_like(V_new, V_INIT), V_new)
        deltas.append(V_new - V)
        spikes.append(spike)
        vouts.append(V_new)
        V = V_new

    # TODO(synk): spikes could be emitted as int8 to cut writeback traffic; kept f32 to
    # match the module's float outputs.
    spike_ref[...] = jnp.concatenate(spikes, axis=0)
    vout_ref[...] = jnp.concatenate(vouts, axis=0)
    # Single unmasked (Tt, Lt) flush of the new history rows at an 8-aligned offset.
    dtr_scr[pl.ds(base, t_tile), :] = jnp.concatenate(deltas, axis=0)
    v_scr[...] = V


# ----------------------------- build helpers -----------------------------
def build_weight_tables(num_steps, seq_len, t_tile):
    """Weight table + intra-block constants for the shifted history layout.

    Row j of delta_trace holds the delta written at global step j (row 0 stays zero).
    memory_V(n) = sum_{j=1}^{n-1} wvec[H - n + j - 1] * delta_j  for n >= 2.
    """
    H, T = num_steps, seq_len
    t_pad = _round_up(T, t_tile)
    h_rows = _round_up(t_pad, 128)      # lane-align the matmul contraction dim
    nv = np.arange(H - 1)
    wvec = ((H + 1 - nv) ** (1.0 - ALPHA) - (H - nv) ** (1.0 - ALPHA)).astype(np.float32)

    W = np.zeros((t_pad, h_rows), np.float32)
    for n in range(2, T):
        for j in range(1, n):
            W[n, j] = wvec[H - n + j - 1]

    # Intra-block weights are independent of the block index: step s of any block reads
    # the delta written at block-local step r (< s) with weight wvec[H - s + r - 1].
    w_intra = []
    for s in range(t_tile):
        row = []
        for r in range(s):
            idx = H - s - 1 + r
            row.append(float(wvec[idx]) if 0 <= idx < H - 1 else 0.0)
        w_intra.append(tuple(row))
    return wvec, jnp.asarray(W), tuple(w_intra), t_pad, h_rows


def _choose_l_tile(layer_size, h_rows, t_tile):
    """Lane tile: multiple of 128 dividing L, VMEM-budgeted, preferring >= 2 tiles
    so the 'parallel' lane axis can shard across v7x's 2 TensorCores."""
    L = layer_size
    if L <= 128 or L % 128 != 0:
        return L
    budget = 24 << 20                                   # conservative (fits v7x's 64 MiB)
    per_lane = 4 * (h_rows + 6 * t_tile + 8)            # dtr + 2x-buffered I/spike/V + V
    max_lt = max(128, (budget // per_lane) // 128 * 128)
    cap = min(max_lt, L // 2)
    best = 128
    for cand in range(256, cap + 1, 128):
        if L % cand == 0:
            best = cand
    return best


def make_flif_sequence(layer_size, num_steps, seq_len, *, t_tile=8, l_tile=None):
    L, H, T = layer_size, num_steps, seq_len
    assert H >= 2 and 2 <= T <= H, "sequence length must be in [2, num_steps]"
    assert t_tile >= 2 and t_tile % 8 == 0

    wvec, W, w_intra, t_pad, h_rows = build_weight_tables(H, T, t_tile)
    Lt = l_tile if l_tile is not None else _choose_l_tile(L, h_rows, t_tile)
    assert L % Lt == 0
    n_l, n_t = L // Lt, t_pad // t_tile

    kernel = functools.partial(_flif_block_kernel, t_tile=t_tile, w_intra=w_intra)

    grid_spec = pltpu.PrefetchScalarGridSpec(
        num_scalar_prefetch=0,
        # Time blocks MUST be the trailing (innermost, sequential) axis: the resident
        # scratch carries state across them and is re-initialized at tb == 0.
        grid=(n_l, n_t),
        in_specs=[
            pl.BlockSpec((t_tile, Lt), lambda l, t: (t, l)),       # I        (t_pad, L)
            pl.BlockSpec((t_tile, h_rows), lambda l, t: (t, 0)),   # W rows   (t_pad, h_rows)
        ],
        out_specs=[
            pl.BlockSpec((t_tile, Lt), lambda l, t: (t, l)),       # spikes   (t_pad, L)
            pl.BlockSpec((t_tile, Lt), lambda l, t: (t, l)),       # volts    (t_pad, L)
        ],
        scratch_shapes=[
            pltpu.VMEM((1, Lt), jnp.float32),        # resident V
            pltpu.VMEM((h_rows, Lt), jnp.float32),   # resident delta_trace
        ],
    )

    # Explicit VMEM budget with headroom (scoped defaults differ across v5e/v6e/v7x).
    need = 4 * (3 * 2 * t_tile * Lt + 2 * t_tile * h_rows + h_rows * Lt + 8 * Lt)
    vmem_limit = int(min(max(4 * need, 16 << 20), 60 << 20))

    fn = pl.pallas_call(
        kernel,
        grid_spec=grid_spec,
        out_shape=(
            jax.ShapeDtypeStruct((t_pad, L), jnp.float32),
            jax.ShapeDtypeStruct((t_pad, L), jnp.float32),
        ),
        compiler_params=pltpu.CompilerParams(
            dimension_semantics=("parallel", "arbitrary"),
            vmem_limit_bytes=vmem_limit),
    )
    return jax.jit(fn), W, t_pad


# ----------------------------- wrapper -----------------------------
class FlifNeuronPallas:
    """Fused-sequence wrapper producing the same per-step outputs as the PyTorch module."""

    def __init__(self, layer_size, num_steps, seq_len=None, t_tile=8, l_tile=None):
        self.layer_size = layer_size
        self.num_steps = num_steps
        self.seq_len = seq_len if seq_len is not None else num_steps
        self._run, self._W, self._t_pad = make_flif_sequence(
            layer_size, num_steps, self.seq_len, t_tile=t_tile, l_tile=l_tile)

    def run_sequence(self, I_seq):
        """I_seq: (T, L) / (T, 1, L) / list of per-step currents.  Returns (spikes, volts),
        each (T, L), matching T successive forward() calls after init_mem()."""
        T, L = self.seq_len, self.layer_size
        if isinstance(I_seq, (list, tuple)):
            I = jnp.stack([jnp.asarray(x).reshape(-1) for x in I_seq])
        else:
            I = jnp.asarray(I_seq)
        I = I.reshape(T, L).astype(jnp.float32)
        if self._t_pad > T:
            I = jnp.pad(I, ((0, self._t_pad - T), (0, 0)))
        spikes, volts = self._run(I, self._W)
        return spikes[:T], volts[:T]


# ------------------- NumPy reference (mirrors the PyTorch code) -------------------
def numpy_reference(I_seq, layer_size, num_steps):
    H, L = num_steps, layer_size
    nv = np.arange(H - 1)
    wvec = ((H + 1 - nv) ** (1.0 - ALPHA) - (H - nv) ** (1.0 - ALPHA)).astype(np.float32)
    N = 0
    V = np.zeros(L, np.float32)
    delta_trace = np.zeros((L, H), np.float32)
    spikes, volts = [], []
    for t in range(len(I_seq)):
        I = I_seq[t]
        if N == 0:
            V_new = np.full(L, V_INIT, np.float32)
            spike = np.zeros(L, np.float32)
            N += 1
            spikes.append(spike); volts.append(V_new); V = V_new
            continue
        if N == 1:
            tau = CM / GL
            V_new = V + DT / tau * (-(V - VL) + I / GL)
        else:
            V_new = (DT ** ALPHA) * GAMMA_2MA * (-GL * (V - VL) + I) / CM + V
            memory_V = delta_trace[:, 0:N - 1] @ wvec[-N + 1:]
            V_new = V_new - memory_V
        spike = (V - THRESHOLD > 0).astype(np.float32)
        reset = spike * (V_new - V_RESET)
        V_new = V_new - reset
        delta_trace[:, N - 1] = V_new - V
        N += 1
        spikes.append(spike); volts.append(V_new); V = V_new
    return spikes, volts


# ----------------------------- demo -----------------------------
if __name__ == "__main__":
    LAYER_SIZE = 256     # -> 2 lane tiles of 128
    NUM_STEPS = 24       # -> 3 time blocks of 8, exercises the resident-history matmul

    neuron = FlifNeuronPallas(LAYER_SIZE, NUM_STEPS)

    key = jax.random.PRNGKey(0)
    keys = jax.random.split(key, NUM_STEPS)
    I_seq = [jax.random.uniform(keys[t], (1, LAYER_SIZE), jnp.float32, 0.0, 12.0)
             for t in range(NUM_STEPS)]

    spikes, volts = neuron.run_sequence(I_seq)
    jax.block_until_ready(volts)

    # Verify against the NumPy transliteration of the PyTorch module.
    I_np = [np.asarray(I).reshape(-1) for I in I_seq]
    ref_spikes, ref_volts = numpy_reference(I_np, LAYER_SIZE, NUM_STEPS)
    spikes_np = np.asarray(spikes)
    volts_np = np.asarray(volts)
    for t in range(NUM_STEPS):
        np.testing.assert_allclose(spikes_np[t], ref_spikes[t], rtol=0, atol=1e-6)
        np.testing.assert_allclose(volts_np[t], ref_volts[t], rtol=5e-4, atol=5e-3)

    print("KERNEL_OK")
</pallas_src>

<mosaic_0001>
module attributes {stable_mosaic.version = 11 : i64} {
  func.func @_flif_block_kernel(%arg0: i32, %arg1: i32, %arg2: memref<8x128xf32, #tpu.memory_space<vmem>>, %arg3: memref<8x128xf32, #tpu.memory_space<vmem>>, %arg4: memref<8x128xf32, #tpu.memory_space<vmem>>, %arg5: memref<8x128xf32, #tpu.memory_space<vmem>>, %arg6: memref<1x128xf32, #tpu.memory_space<vmem>>, %arg7: memref<128x128xf32, #tpu.memory_space<vmem>>) attributes {dimension_semantics = [#tpu.dimension_semantics<parallel>, #tpu.dimension_semantics<arbitrary>], iteration_bounds = array<i64: 2, 3>, scalar_prefetch = 0 : i64, scratch_operands = 2 : i64, tpu.core_type = #tpu.core_type<tc>, window_params = [{transform_indices = @transform_0, window_bounds = array<i64: 8, 128>}, {transform_indices = @transform_1, window_bounds = array<i64: 8, 128>}, {transform_indices = @transform_2, window_bounds = array<i64: 8, 128>}, {transform_indices = @transform_3, window_bounds = array<i64: 8, 128>}]} {
    %c8_i32 = arith.constant 8 : i32
    %0 = arith.muli %arg1, %c8_i32 : i32
    %1 = tpu.assume_multiple %0, 8 : i32
    %c0_i32 = arith.constant 0 : i32
    %2 = arith.cmpi eq, %arg1, %c0_i32 : i32
    %3 = arith.extui %2 : i1 to i32
    %c0_i32_0 = arith.constant 0 : i32
    %4 = arith.cmpi ne, %3, %c0_i32_0 : i32
    scf.if %4 {
      %cst_93 = arith.constant 0.000000e+00 : f32
      %281 = vector.broadcast %cst_93 : f32 to vector<128x128xf32>
      %c0_94 = arith.constant 0 : index
      %c0_95 = arith.constant 0 : index
      %282 = vector.load %arg7[%c0_94, %c0_95] : memref<128x128xf32, #tpu.memory_space<vmem>>, vector<128x128xf32>
      tpu.vector_store %arg7[%c0_94, %c0_95], %281 {strides = array<i32>} : memref<128x128xf32, #tpu.memory_space<vmem>>, vector<128x128xf32>,
      %cst_96 = arith.constant -7.000000e+01 : f32
      %283 = vector.broadcast %cst_96 : f32 to vector<1x128xf32>
      %c0_97 = arith.constant 0 : index
      %c0_98 = arith.constant 0 : index
      %284 = vector.load %arg6[%c0_97, %c0_98] : memref<1x128xf32, #tpu.memory_space<vmem>>, vector<1x128xf32>
      tpu.vector_store %arg6[%c0_97, %c0_98], %283 {strides = array<i32>} : memref<1x128xf32, #tpu.memory_space<vmem>>, vector<1x128xf32>,
    } else {
    }
    %c0 = arith.constant 0 : index
    %c0_1 = arith.constant 0 : index
    %5 = vector.load %arg3[%c0, %c0_1] : memref<8x128xf32, #tpu.memory_space<vmem>>, vector<8x128xf32>
    %c0_2 = arith.constant 0 : index
    %c0_3 = arith.constant 0 : index
    %6 = vector.load %arg7[%c0_2, %c0_3] : memref<128x128xf32, #tpu.memory_space<vmem>>, vector<128x128xf32>
    %cst = arith.constant dense<0.000000e+00> : vector<8x128xf32>
    %7 = tpu.matmul %5, %6, %cst {dimension_numbers = #tpu.dot_dimension_numbers<[1], [0], [0], [1], [0, 0, 1, 1], [], []>, precision = #tpu.contract_precision<fp32>} : vector<8x128xf32>, vector<128x128xf32>, vector<8x128xf32> -> vector<8x128xf32>
    %c0_4 = arith.constant 0 : index
    %c0_5 = arith.constant 0 : index
    %8 = vector.load %arg2[%c0_4, %c0_5] : memref<8x128xf32, #tpu.memory_space<vmem>>, vector<8x128xf32>
    %c0_6 = arith.constant 0 : index
    %c0_7 = arith.constant 0 : index
    %9 = vector.load %arg6[%c0_6, %c0_7] : memref<1x128xf32, #tpu.memory_space<vmem>>, vector<1x128xf32>
    %10 = vector.extract_strided_slice %8 {offsets = [0, 0], sizes = [1, 128], strides = [1, 1]} : vector<8x128xf32> to vector<1x128xf32>
    %cst_8 = arith.constant -7.000000e+01 : f32
    %11 = vector.broadcast %cst_8 : f32 to vector<1x128xf32>
    %12 = arith.subf %9, %11 : vector<1x128xf32>
    %cst_9 = arith.constant 2.500000e-02 : f32
    %13 = vector.broadcast %cst_9 : f32 to vector<1x128xf32>
    %14 = arith.mulf %13, %12 : vector<1x128xf32>
    %15 = arith.subf %10, %14 : vector<1x128xf32>
    %16 = vector.extract_strided_slice %7 {offsets = [0, 0], sizes = [1, 128], strides = [1, 1]} : vector<8x128xf32> to vector<1x128xf32>
    %cst_10 = arith.constant 1.86276758 : f32
    %17 = vector.broadcast %cst_10 : f32 to vector<1x128xf32>
    %18 = arith.mulf %17, %15 : vector<1x128xf32>
    %19 = arith.addf %9, %18 : vector<1x128xf32>
    %20 = arith.subf %19, %16 : vector<1x128xf32>
    %cst_11 = arith.constant -5.000000e+01 : f32
    %21 = vector.broadcast %cst_11 : f32 to vector<1x128xf32>
    %22 = arith.subf %9, %21 : vector<1x128xf32>
    %cst_12 = arith.constant 0.000000e+00 : f32
    %23 = vector.broadcast %cst_12 : f32 to vector<1x128xf32>
    %24 = arith.cmpf ogt, %22, %23 : vector<1x128xf32>
    %25 = arith.extui %24 : vector<1x128xi1> to vector<1x128xi32>
    %26 = arith.sitofp %25 : vector<1x128xi32> to vector<1x128xf32>
    %cst_13 = arith.constant -7.000000e+01 : f32
    %27 = vector.broadcast %cst_13 : f32 to vector<1x128xf32>
    %28 = arith.subf %20, %27 : vector<1x128xf32>
    %29 = arith.mulf %26, %28 : vector<1x128xf32>
    %30 = arith.subf %20, %29 : vector<1x128xf32>
    %cst_14 = arith.constant -7.000000e+01 : f32
    %31 = vector.broadcast %cst_14 : f32 to vector<1x128xf32>
    %32 = arith.select %2, %31, %30 : vector<1x128xf32>
    %33 = arith.subf %32, %9 : vector<1x128xf32>
    %34 = vector.extract_strided_slice %8 {offsets = [1, 0], sizes = [1, 128], strides = [1, 1]} : vector<8x128xf32> to vector<1x128xf32>
    %cst_15 = arith.constant -7.000000e+01 : f32
    %35 = vector.broadcast %cst_15 : f32 to vector<1x128xf32>
    %36 = arith.subf %32, %35 : vector<1x128xf32>
    %cst_16 = arith.constant 2.500000e-02 : f32
    %37 = vector.broadcast %cst_16 : f32 to vector<1x128xf32>
    %38 = arith.mulf %37, %36 : vector<1x128xf32>
    %39 = arith.subf %34, %38 : vector<1x128xf32>
    %40 = vector.extract_strided_slice %7 {offsets = [1, 0], sizes = [1, 128], strides = [1, 1]} : vector<8x128xf32> to vector<1x128xf32>
    %cst_17 = arith.constant 0.667123556 : f32
    %41 = vector.broadcast %cst_17 : f32 to vector<1x128xf32>
    %42 = arith.mulf %41, %33 : vector<1x128xf32>
    %43 = arith.addf %40, %42 : vector<1x128xf32>
    %cst_18 = arith.constant 2.000000e+00 : f32
    %cst_19 = arith.constant 1.86276758 : f32
    %44 = arith.select %2, %cst_18, %cst_19 : f32
    %45 = vector.broadcast %44 : f32 to vector<1x128xf32>
    %46 = arith.mulf %45, %39 : vector<1x128xf32>
    %47 = arith.addf %32, %46 : vector<1x128xf32>
    %48 = arith.subf %47, %43 : vector<1x128xf32>
    %cst_20 = arith.constant -5.000000e+01 : f32
    %49 = vector.broadcast %cst_20 : f32 to vector<1x128xf32>
    %50 = arith.subf %32, %49 : vector<1x128xf32>
    %cst_21 = arith.constant 0.000000e+00 : f32
    %51 = vector.broadcast %cst_21 : f32 to vector<1x128xf32>
    %52 = arith.cmpf ogt, %50, %51 : vector<1x128xf32>
    %53 = arith.extui %52 : vector<1x128xi1> to vector<1x128xi32>
    %54 = arith.sitofp %53 : vector<1x128xi32> to vector<1x128xf32>
    %cst_22 = arith.constant -7.000000e+01 : f32
    %55 = vector.broadcast %cst_22 : f32 to vector<1x128xf32>
    %56 = arith.subf %48, %55 : vector<1x128xf32>
    %57 = arith.mulf %54, %56 : vector<1x128xf32>
    %58 = arith.subf %48, %57 : vector<1x128xf32>
    %59 = arith.subf %58, %32 : vector<1x128xf32>
    %60 = vector.extract_strided_slice %8 {offsets = [2, 0], sizes = [1, 128], strides = [1, 1]} : vector<8x128xf32> to vector<1x128xf32>
    %cst_23 = arith.constant -7.000000e+01 : f32
    %61 = vector.broadcast %cst_23 : f32 to vector<1x128xf32>
    %62 = arith.subf %58, %61 : vector<1x128xf32>
    %cst_24 = arith.constant 2.500000e-02 : f32
    %63 = vector.broadcast %cst_24 : f32 to vector<1x128xf32>
    %64 = arith.mulf %63, %62 : vector<1x128xf32>
    %65 = arith.subf %60, %64 : vector<1x128xf32>
    %66 = vector.extract_strided_slice %7 {offsets = [2, 0], sizes = [1, 128], strides = [1, 1]} : vector<8x128xf32> to vector<1x128xf32>
    %cst_25 = arith.constant 0.623208463 : f32
    %67 = vector.broadcast %cst_25 : f32 to vector<1x128xf32>
    %68 = arith.mulf %67, %33 : vector<1x128xf32>
    %69 = arith.addf %66, %68 : vector<1x128xf32>
    %cst_26 = arith.constant 0.667123556 : f32
    %70 = vector.broadcast %cst_26 : f32 to vector<1x128xf32>
    %71 = arith.mulf %70, %59 : vector<1x128xf32>
    %72 = arith.addf %69, %71 : vector<1x128xf32>
    %cst_27 = arith.constant 1.86276758 : f32
    %73 = vector.broadcast %cst_27 : f32 to vector<1x128xf32>
    %74 = arith.mulf %73, %65 : vector<1x128xf32>
    %75 = arith.addf %58, %74 : vector<1x128xf32>
    %76 = arith.subf %75, %72 : vector<1x128xf32>
    %cst_28 = arith.constant -5.000000e+01 : f32
    %77 = vector.broadcast %cst_28 : f32 to vector<1x128xf32>
    %78 = arith.subf %58, %77 : vector<1x128xf32>
    %cst_29 = arith.constant 0.000000e+00 : f32
    %79 = vector.broadcast %cst_29 : f32 to vector<1x128xf32>
    %80 = arith.cmpf ogt, %78, %79 : vector<1x128xf32>
    %81 = arith.extui %80 : vector<1x128xi1> to vector<1x128xi32>
    %82 = arith.sitofp %81 : vector<1x128xi32> to vector<1x128xf32>
    %cst_30 = arith.constant -7.000000e+01 : f32
    %83 = vector.broadcast %cst_30 : f32 to vector<1x128xf32>
    %84 = arith.subf %76, %83 : vector<1x128xf32>
    %85 = arith.mulf %82, %84 : vector<1x128xf32>
    %86 = arith.subf %76, %85 : vector<1x128xf32>
    %87 = arith.subf %86, %58 : vector<1x128xf32>
    %88 = vector.extract_strided_slice %8 {offsets = [3, 0], sizes = [1, 128], strides = [1, 1]} : vector<8x128xf32> to vector<1x128xf32>
    %cst_31 = arith.constant -7.000000e+01 : f32
    %89 = vector.broadcast %cst_31 : f32 to vector<1x128xf32>
    %90 = arith.subf %86, %89 : vector<1x128xf32>
    %cst_32 = arith.constant 2.500000e-02 : f32
    %91 = vector.broadcast %cst_32 : f32 to vector<1x128xf32>
    %92 = arith.mulf %91, %90 : vector<1x128xf32>
    %93 = arith.subf %88, %92 : vector<1x128xf32>
    %94 = vector.extract_strided_slice %7 {offsets = [3, 0], sizes = [1, 128], strides = [1, 1]} : vector<8x128xf32> to vector<1x128xf32>
    %cst_33 = arith.constant 0.592465162 : f32
    %95 = vector.broadcast %cst_33 : f32 to vector<1x128xf32>
    %96 = arith.mulf %95, %33 : vector<1x128xf32>
    %97 = arith.addf %94, %96 : vector<1x128xf32>
    %cst_34 = arith.constant 0.623208463 : f32
    %98 = vector.broadcast %cst_34 : f32 to vector<1x128xf32>
    %99 = arith.mulf %98, %59 : vector<1x128xf32>
    %100 = arith.addf %97, %99 : vector<1x128xf32>
    %cst_35 = arith.constant 0.667123556 : f32
    %101 = vector.broadcast %cst_35 : f32 to vector<1x128xf32>
    %102 = arith.mulf %101, %87 : vector<1x128xf32>
    %103 = arith.addf %100, %102 : vector<1x128xf32>
    %cst_36 = arith.constant 1.86276758 : f32
    %104 = vector.broadcast %cst_36 : f32 to vector<1x128xf32>
    %105 = arith.mulf %104, %93 : vector<1x128xf32>
    %106 = arith.addf %86, %105 : vector<1x128xf32>
    %107 = arith.subf %106, %103 : vector<1x128xf32>
    %cst_37 = arith.constant -5.000000e+01 : f32
    %108 = vector.broadcast %cst_37 : f32 to vector<1x128xf32>
    %109 = arith.subf %86, %108 : vector<1x128xf32>
    %cst_38 = arith.constant 0.000000e+00 : f32
    %110 = vector.broadcast %cst_38 : f32 to vector<1x128xf32>
    %111 = arith.cmpf ogt, %109, %110 : vector<1x128xf32>
    %112 = arith.extui %111 : vector<1x128xi1> to vector<1x128xi32>
    %113 = arith.sitofp %112 : vector<1x128xi32> to vector<1x128xf32>
    %cst_39 = arith.constant -7.000000e+01 : f32
    %114 = vector.broadcast %cst_39 : f32 to vector<1x128xf32>
    %115 = arith.subf %107, %114 : vector<1x128xf32>
    %116 = arith.mulf %113, %115 : vector<1x128xf32>
    %117 = arith.subf %107, %116 : vector<1x128xf32>
    %118 = arith.subf %117, %86 : vector<1x128xf32>
    %119 = vector.extract_strided_slice %8 {offsets = [4, 0], sizes = [1, 128], strides = [1, 1]} : vector<8x128xf32> to vector<1x128xf32>
    %cst_40 = arith.constant -7.000000e+01 : f32
    %120 = vector.broadcast %cst_40 : f32 to vector<1x128xf32>
    %121 = arith.subf %117, %120 : vector<1x128xf32>
    %cst_41 = arith.constant 2.500000e-02 : f32
    %122 = vector.broadcast %cst_41 : f32 to vector<1x128xf32>
    %123 = arith.mulf %122, %121 : vector<1x128xf32>
    %124 = arith.subf %119, %123 : vector<1x128xf32>
    %125 = vector.extract_strided_slice %7 {offsets = [4, 0], sizes = [1, 128], strides = [1, 1]} : vector<8x128xf32> to vector<1x128xf32>
    %cst_42 = arith.constant 0.569064379 : f32
    %126 = vector.broadcast %cst_42 : f32 to vector<1x128xf32>
    %127 = arith.mulf %126, %33 : vector<1x128xf32>
    %128 = arith.addf %125, %127 : vector<1x128xf32>
    %cst_43 = arith.constant 0.592465162 : f32
    %129 = vector.broadcast %cst_43 : f32 to vector<1x128xf32>
    %130 = arith.mulf %129, %59 : vector<1x128xf32>
    %131 = arith.addf %128, %130 : vector<1x128xf32>
    %cst_44 = arith.constant 0.623208463 : f32
    %132 = vector.broadcast %cst_44 : f32 to vector<1x128xf32>
    %133 = arith.mulf %132, %87 : vector<1x128xf32>
    %134 = arith.addf %131, %133 : vector<1x128xf32>
    %cst_45 = arith.constant 0.667123556 : f32
    %135 = vector.broadcast %cst_45 : f32 to vector<1x128xf32>
    %136 = arith.mulf %135, %118 : vector<1x128xf32>
    %137 = arith.addf %134, %136 : vector<1x128xf32>
    %cst_46 = arith.constant 1.86276758 : f32
    %138 = vector.broadcast %cst_46 : f32 to vector<1x128xf32>
    %139 = arith.mulf %138, %124 : vector<1x128xf32>
    %140 = arith.addf %117, %139 : vector<1x128xf32>
    %141 = arith.subf %140, %137 : vector<1x128xf32>
    %cst_47 = arith.constant -5.000000e+01 : f32
    %142 = vector.broadcast %cst_47 : f32 to vector<1x128xf32>
    %143 = arith.subf %117, %142 : vector<1x128xf32>
    %cst_48 = arith.constant 0.000000e+00 : f32
    %144 = vector.broadcast %cst_48 : f32 to vector<1x128xf32>
    %145 = arith.cmpf ogt, %143, %144 : vector<1x128xf32>
    %146 = arith.extui %145 : vector<1x128xi1> to vector<1x128xi32>
    %147 = arith.sitofp %146 : vector<1x128xi32> to vector<1x128xf32>
    %cst_49 = arith.constant -7.000000e+01 : f32
    %148 = vector.broadcast %cst_49 : f32 to vector<1x128xf32>
    %149 = arith.subf %141, %148 : vector<1x128xf32>
    %150 = arith.mulf %147, %149 : vector<1x128xf32>
    %151 = arith.subf %141, %150 : vector<1x128xf32>
    %152 = arith.subf %151, %117 : vector<1x128xf32>
    %153 = vector.extract_strided_slice %8 {offsets = [5, 0], sizes = [1, 128], strides = [1, 1]} : vector<8x128xf32> to vector<1x128xf32>
    %cst_50 = arith.constant -7.000000e+01 : f32
    %154 = vector.broadcast %cst_50 : f32 to vector<1x128xf32>
    %155 = arith.subf %151, %154 : vector<1x128xf32>
    %cst_51 = arith.constant 2.500000e-02 : f32
    %156 = vector.broadcast %cst_51 : f32 to vector<1x128xf32>
    %157 = arith.mulf %156, %155 : vector<1x128xf32>
    %158 = arith.subf %153, %157 : vector<1x128xf32>
    %159 = vector.extract_strided_slice %7 {offsets = [5, 0], sizes = [1, 128], strides = [1, 1]} : vector<8x128xf32> to vector<1x128xf32>
    %cst_52 = arith.constant 0.550313652 : f32
    %160 = vector.broadcast %cst_52 : f32 to vector<1x128xf32>
    %161 = arith.mulf %160, %33 : vector<1x128xf32>
    %162 = arith.addf %159, %161 : vector<1x128xf32>
    %cst_53 = arith.constant 0.569064379 : f32
    %163 = vector.broadcast %cst_53 : f32 to vector<1x128xf32>
    %164 = arith.mulf %163, %59 : vector<1x128xf32>
    %165 = arith.addf %162, %164 : vector<1x128xf32>
    %cst_54 = arith.constant 0.592465162 : f32
    %166 = vector.broadcast %cst_54 : f32 to vector<1x128xf32>
    %167 = arith.mulf %166, %87 : vector<1x128xf32>
    %168 = arith.addf %165, %167 : vector<1x128xf32>
    %cst_55 = arith.constant 0.623208463 : f32
    %169 = vector.broadcast %cst_55 : f32 to vector<1x128xf32>
    %170 = arith.mulf %169, %118 : vector<1x128xf32>
    %171 = arith.addf %168, %170 : vector<1x128xf32>
    %cst_56 = arith.constant 0.667123556 : f32
    %172 = vector.broadcast %cst_56 : f32 to vector<1x128xf32>
    %173 = arith.mulf %172, %152 : vector<1x128xf32>
    %174 = arith.addf %171, %173 : vector<1x128xf32>
    %cst_57 = arith.constant 1.86276758 : f32
    %175 = vector.broadcast %cst_57 : f32 to vector<1x128xf32>
    %176 = arith.mulf %175, %158 : vector<1x128xf32>
    %177 = arith.addf %151, %176 : vector<1x128xf32>
    %178 = arith.subf %177, %174 : vector<1x128xf32>
    %cst_58 = arith.constant -5.000000e+01 : f32
    %179 = vector.broadcast %cst_58 : f32 to vector<1x128xf32>
    %180 = arith.subf %151, %179 : vector<1x128xf32>
    %cst_59 = arith.constant 0.000000e+00 : f32
    %181 = vector.broadcast %cst_59 : f32 to vector<1x128xf32>
    %182 = arith.cmpf ogt, %180, %181 : vector<1x128xf32>
    %183 = arith.extui %182 : vector<1x128xi1> to vector<1x128xi32>
    %184 = arith.sitofp %183 : vector<1x128xi32> to vector<1x128xf32>
    %cst_60 = arith.constant -7.000000e+01 : f32
    %185 = vector.broadcast %cst_60 : f32 to vector<1x128xf32>
    %186 = arith.subf %178, %185 : vector<1x128xf32>
    %187 = arith.mulf %184, %186 : vector<1x128xf32>
    %188 = arith.subf %178, %187 : vector<1x128xf32>
    %189 = arith.subf %188, %151 : vector<1x128xf32>
    %190 = vector.extract_strided_slice %8 {offsets = [6, 0], sizes = [1, 128], strides = [1, 1]} : vector<8x128xf32> to vector<1x128xf32>
    %cst_61 = arith.constant -7.000000e+01 : f32
    %191 = vector.broadcast %cst_61 : f32 to vector<1x128xf32>
    %192 = arith.subf %188, %191 : vector<1x128xf32>
    %cst_62 = arith.constant 2.500000e-02 : f32
    %193 = vector.broadcast %cst_62 : f32 to vector<1x128xf32>
    %194 = arith.mulf %193, %192 : vector<1x128xf32>
    %195 = arith.subf %190, %194 : vector<1x128xf32>
    %196 = vector.extract_strided_slice %7 {offsets = [6, 0], sizes = [1, 128], strides = [1, 1]} : vector<8x128xf32> to vector<1x128xf32>
    %cst_63 = arith.constant 0.53475523 : f32
    %197 = vector.broadcast %cst_63 : f32 to vector<1x128xf32>
    %198 = arith.mulf %197, %33 : vector<1x128xf32>
    %199 = arith.addf %196, %198 : vector<1x128xf32>
    %cst_64 = arith.constant 0.550313652 : f32
    %200 = vector.broadcast %cst_64 : f32 to vector<1x128xf32>
    %201 = arith.mulf %200, %59 : vector<1x128xf32>
    %202 = arith.addf %199, %201 : vector<1x128xf32>
    %cst_65 = arith.constant 0.569064379 : f32
    %203 = vector.broadcast %cst_65 : f32 to vector<1x128xf32>
    %204 = arith.mulf %203, %87 : vector<1x128xf32>
    %205 = arith.addf %202, %204 : vector<1x128xf32>
    %cst_66 = arith.constant 0.592465162 : f32
    %206 = vector.broadcast %cst_66 : f32 to vector<1x128xf32>
    %207 = arith.mulf %206, %118 : vector<1x128xf32>
    %208 = arith.addf %205, %207 : vector<1x128xf32>
    %cst_67 = arith.constant 0.623208463 : f32
    %209 = vector.broadcast %cst_67 : f32 to vector<1x128xf32>
    %210 = arith.mulf %209, %152 : vector<1x128xf32>
    %211 = arith.addf %208, %210 : vector<1x128xf32>
    %cst_68 = arith.constant 0.667123556 : f32
    %212 = vector.broadcast %cst_68 : f32 to vector<1x128xf32>
    %213 = arith.mulf %212, %189 : vector<1x128xf32>
    %214 = arith.addf %211, %213 : vector<1x128xf32>
    %cst_69 = arith.constant 1.86276758 : f32
    %215 = vector.broadcast %cst_69 : f32 to vector<1x128xf32>
    %216 = arith.mulf %215, %195 : vector<1x128xf32>
    %217 = arith.addf %188, %216 : vector<1x128xf32>
    %218 = arith.subf %217, %214 : vector<1x128xf32>
    %cst_70 = arith.constant -5.000000e+01 : f32
    %219 = vector.broadcast %cst_70 : f32 to vector<1x128xf32>
    %220 = arith.subf %188, %219 : vector<1x128xf32>
    %cst_71 = arith.constant 0.000000e+00 : f32
    %221 = vector.broadcast %cst_71 : f32 to vector<1x128xf32>
    %222 = arith.cmpf ogt, %220, %221 : vector<1x128xf32>
    %223 = arith.extui %222 : vector<1x128xi1> to vector<1x128xi32>
    %224 = arith.sitofp %223 : vector<1x128xi32> to vector<1x128xf32>
    %cst_72 = arith.constant -7.000000e+01 : f32
    %225 = vector.broadcast %cst_72 : f32 to vector<1x128xf32>
    %226 = arith.subf %218, %225 : vector<1x128xf32>
    %227 = arith.mulf %224, %226 : vector<1x128xf32>
    %228 = arith.subf %218, %227 : vector<1x128xf32>
    %229 = arith.subf %228, %188 : vector<1x128xf32>
    %230 = vector.extract_strided_slice %8 {offsets = [7, 0], sizes = [1, 128], strides = [1, 1]} : vector<8x128xf32> to vector<1x128xf32>
    %cst_73 = arith.constant -7.000000e+01 : f32
    %231 = vector.broadcast %cst_73 : f32 to vector<1x128xf32>
    %232 = arith.subf %228, %231 : vector<1x128xf32>
    %cst_74 = arith.constant 2.500000e-02 : f32
    %233 = vector.broadcast %cst_74 : f32 to vector<1x128xf32>
    %234 = arith.mulf %233, %232 : vector<1x128xf32>
    %235 = arith.subf %230, %234 : vector<1x128xf32>
    %236 = vector.extract_strided_slice %7 {offsets = [7, 0], sizes = [1, 128], strides = [1, 1]} : vector<8x128xf32> to vector<1x128xf32>
    %cst_75 = arith.constant 0.521514475 : f32
    %237 = vector.broadcast %cst_75 : f32 to vector<1x128xf32>
    %238 = arith.mulf %237, %33 : vector<1x128xf32>
    %239 = arith.addf %236, %238 : vector<1x128xf32>
    %cst_76 = arith.constant 0.53475523 : f32
    %240 = vector.broadcast %cst_76 : f32 to vector<1x128xf32>
    %241 = arith.mulf %240, %59 : vector<1x128xf32>
    %242 = arith.addf %239, %241 : vector<1x128xf32>
    %cst_77 = arith.constant 0.550313652 : f32
    %243 = vector.broadcast %cst_77 : f32 to vector<1x128xf32>
    %244 = arith.mulf %243, %87 : vector<1x128xf32>
    %245 = arith.addf %242, %244 : vector<1x128xf32>
    %cst_78 = arith.constant 0.569064379 : f32
    %246 = vector.broadcast %cst_78 : f32 to vector<1x128xf32>
    %247 = arith.mulf %246, %118 : vector<1x128xf32>
    %248 = arith.addf %245, %247 : vector<1x128xf32>
    %cst_79 = arith.constant 0.592465162 : f32
    %249 = vector.broadcast %cst_79 : f32 to vector<1x128xf32>
    %250 = arith.mulf %249, %152 : vector<1x128xf32>
    %251 = arith.addf %248, %250 : vector<1x128xf32>
    %cst_80 = arith.constant 0.623208463 : f32
    %252 = vector.broadcast %cst_80 : f32 to vector<1x128xf32>
    %253 = arith.mulf %252, %189 : vector<1x128xf32>
    %254 = arith.addf %251, %253 : vector<1x128xf32>
    %cst_81 = arith.constant 0.667123556 : f32
    %255 = vector.broadcast %cst_81 : f32 to vector<1x128xf32>
    %256 = arith.mulf %255, %229 : vector<1x128xf32>
    %257 = arith.addf %254, %256 : vector<1x128xf32>
    %cst_82 = arith.constant 1.86276758 : f32
    %258 = vector.broadcast %cst_82 : f32 to vector<1x128xf32>
    %259 = arith.mulf %258, %235 : vector<1x128xf32>
    %260 = arith.addf %228, %259 : vector<1x128xf32>
    %261 = arith.subf %260, %257 : vector<1x128xf32>
    %cst_83 = arith.constant -5.000000e+01 : f32
    %262 = vector.broadcast %cst_83 : f32 to vector<1x128xf32>
    %263 = arith.subf %228, %262 : vector<1x128xf32>
    %cst_84 = arith.constant 0.000000e+00 : f32
    %264 = vector.broadcast %cst_84 : f32 to vector<1x128xf32>
    %265 = arith.cmpf ogt, %263, %264 : vector<1x128xf32>
    %266 = arith.extui %265 : vector<1x128xi1> to vector<1x128xi32>
    %267 = arith.sitofp %266 : vector<1x128xi32> to vector<1x128xf32>
    %cst_85 = arith.constant -7.000000e+01 : f32
    %268 = vector.broadcast %cst_85 : f32 to vector<1x128xf32>
    %269 = arith.subf %261, %268 : vector<1x128xf32>
    %270 = arith.mulf %267, %269 : vector<1x128xf32>
    %271 = arith.subf %261, %270 : vector<1x128xf32>
    %272 = arith.subf %271, %228 : vector<1x128xf32>
    %273 = tpu.concatenate %26, %54, %82, %113, %147, %184, %224, %267 in 0 : vector<1x128xf32>, vector<1x128xf32>, vector<1x128xf32>, vector<1x128xf32>, vector<1x128xf32>, vector<1x128xf32>, vector<1x128xf32>, vector<1x128xf32> -> vector<8x128xf32>
    %c0_86 = arith.constant 0 : index
    %c0_87 = arith.constant 0 : index
    %274 = vector.load %arg4[%c0_86, %c0_87] : memref<8x128xf32, #tpu.memory_space<vmem>>, vector<8x128xf32>
    tpu.vector_store %arg4[%c0_86, %c0_87], %273 {strides = array<i32>} : memref<8x128xf32, #tpu.memory_space<vmem>>, vector<8x128xf32>,
    %275 = tpu.concatenate %32, %58, %86, %117, %151, %188, %228, %271 in 0 : vector<1x128xf32>, vector<1x128xf32>, vector<1x128xf32>, vector<1x128xf32>, vector<1x128xf32>, vector<1x128xf32>, vector<1x128xf32>, vector<1x128xf32> -> vector<8x128xf32>
    %c0_88 = arith.constant 0 : index
    %c0_89 = arith.constant 0 : index
    %276 = vector.load %arg5[%c0_88, %c0_89] : memref<8x128xf32, #tpu.memory_space<vmem>>, vector<8x128xf32>
    tpu.vector_store %arg5[%c0_88, %c0_89], %275 {strides = array<i32>} : memref<8x128xf32, #tpu.memory_space<vmem>>, vector<8x128xf32>,
    %277 = tpu.concatenate %33, %59, %87, %118, %152, %189, %229, %272 in 0 : vector<1x128xf32>, vector<1x128xf32>, vector<1x128xf32>, vector<1x128xf32>, vector<1x128xf32>, vector<1x128xf32>, vector<1x128xf32>, vector<1x128xf32> -> vector<8x128xf32>
    %278 = arith.index_cast %1 : i32 to index
    %c0_90 = arith.constant 0 : index
    %279 = vector.load %arg7[%278, %c0_90] : memref<128x128xf32, #tpu.memory_space<vmem>>, vector<8x128xf32>
    tpu.vector_store %arg7[%278, %c0_90], %277 {strides = array<i32>} : memref<128x128xf32, #tpu.memory_space<vmem>>, vector<8x128xf32>,
    %c0_91 = arith.constant 0 : index
    %c0_92 = arith.constant 0 : index
    %280 = vector.load %arg6[%c0_91, %c0_92] : memref<1x128xf32, #tpu.memory_space<vmem>>, vector<1x128xf32>
    tpu.vector_store %arg6[%c0_91, %c0_92], %271 {strides = array<i32>} : memref<1x128xf32, #tpu.memory_space<vmem>>, vector<1x128xf32>,
    return
  }
  func.func @transform_0(%arg0: i32, %arg1: i32) -> (i32, i32) {
    %c0_i32 = arith.constant 0 : i32
    return %arg1, %arg0 : i32, i32
  }
  func.func @transform_1(%arg0: i32, %arg1: i32) -> (i32, i32) {
    %c0_i32 = arith.constant 0 : i32
    %c0_i32_0 = arith.constant 0 : i32
    return %arg1, %c0_i32 : i32, i32
  }
  func.func @transform_2(%arg0: i32, %arg1: i32) -> (i32, i32) {
    %c0_i32 = arith.constant 0 : i32
    return %arg1, %arg0 : i32, i32
  }
  func.func @transform_3(%arg0: i32, %arg1: i32) -> (i32, i32) {
    %c0_i32 = arith.constant 0 : i32
    return %arg1, %arg0 : i32, i32
  }
}

</mosaic_0001>

<llo_original>
// kernel: tpu_custom_call.1
$region0: #{tpu_custom_call.1}
  #allocation0 [shape = 'u32[]', space=smem, size = 0x4, offset = 0x4, fixed_abs, tag = 'smem constant byte address 0x4 - core index']
  #allocation1 [shape = 'u32[144,128]{1,0:T(1,128)}', space=vmem, size = 0x12000, scoped, tag = 'internal scratch']
  #allocation2 [shape = 'f32[1,128]{1,0:T(1,128)}', space=vmem, size = 0x200, scoped, tag = 'scratch operand']
  #allocation3 [shape = 'f32[128,128]{1,0:T(8,128)}', space=vmem, size = 0x10000, scoped, tag = 'scratch operand']
  %s0 = inlined_call_operand.hbm [shape: f32[24,256], index: 0, kind: input, shape index: {}]
  %s1 = inlined_call_operand.hbm [shape: f32[24,128], index: 1, kind: input, shape index: {}]
  %s2 = inlined_call_operand.hbm [shape: f32[24,256], index: 2, kind: output, shape index: {0}]
  %s3 = inlined_call_operand.hbm [shape: f32[24,256], index: 3, kind: output, shape index: {1}]
  %4 = xla_tuple %s2, %s3
  %s5 = sld [smem:[#allocation0]]
  $region61: #{tpu_custom_call.1} parent=0
    _
  %s7 = ssub.s32 1, %s5
  %s8 = scalar_select 0, %s7, %s5
  $region1: #{tpu_custom_call.1} parent=0
    #allocation4 [shape = 'u8[8192]{0}', space=vmem, size = 0x2000, scoped, tag = 'input window, operand 0']
    #allocation5 [shape = 's32[2]{0}', space=sflag, size = 0x8, scoped, tag = 'scoped memory for tpu_custom_call.1']
    #allocation6 [shape = 's32[2]{0}', space=sflag, size = 0x8, scoped, tag = 'scoped memory for tpu_custom_call.1']
    #allocation7 [shape = 'u8[8192]{0}', space=vmem, size = 0x2000, scoped, tag = 'input window, operand 1']
    #allocation8 [shape = 's32[2]{0}', space=sflag, size = 0x8, scoped, tag = 'scoped memory for tpu_custom_call.1']
    #allocation9 [shape = 'u8[8192]{0}', space=vmem, size = 0x2000, scoped, tag = 'output window, operand 0']
    #allocation10 [shape = 'u8[8192]{0}', space=vmem, size = 0x2000, scoped, tag = 'output window, operand 1']
    #allocation11 [shape = 's32[2]{0}', space=sflag, size = 0x8, scoped, tag = 'scoped memory for tpu_custom_call.1']
    %9 = vsyncpa [#allocation5], 0
    %s10 = scalar_lea.sflag [#allocation5], 1
    %11 = vsyncpa %s10, 0
    %12 = vsyncpa [#allocation8], 0
    %s13 = scalar_lea.sflag [#allocation8], 1
    %14 = vsyncpa %s13, 0
    %15 = vsyncpa [#allocation6], 0
    %s16 = scalar_lea.sflag [#allocation6], 1
    %17 = vsyncpa %s16, 0
    %18 = vsyncpa [#allocation11], 0
    %s19 = scalar_lea.sflag [#allocation11], 1
    %20 = vsyncpa %s19, 0
    loop: start=0, step=1, limit=8
    $region2: #{tpu_custom_call.1} parent=1 // loop_pre_header
      _
    $region3: #{tpu_custom_call.1} parent=1 // loop_header
      %s22 = sphi 0, %s26
      %p23 = scmp.ge.s32.totalorder %s22, 8
      %s29 = sphi 0, %s41
      %s30 = sphi 0, %s37
      %s31 = sphi 0, %s29
      %s32 = sphi 0, %s30
      %s33 = sphi 0, %s31
      %s34 = sphi 0, %s32
      %s46 = sphi 0, %s48
      %s49 = sphi 0, %s46
      %s50 = sphi 0, %s49
      %s66 = sphi 0, %s50
      %s72 = sphi 0, %s74
      %s75 = sphi 0, %s72
      %s76 = sphi 0, %s75
      %s92 = sphi 0, %s76
      %s100 = sphi 0, %s102
      %s103 = sphi 0, %s100
      %s104 = sphi 0, %s103
      %s120 = sphi 0, %s104
      %s128 = sphi 0, %s130
      %s131 = sphi 0, %s128
      %s132 = sphi 0, %s131
      %s148 = sphi 0, %s132
    $region4: #{tpu_custom_call.1} parent=1 // loop_header_branch
      %25 = sbr.rel (%p23) target = $region8
    $region5: #{tpu_custom_call.1} parent=1 // loop_body
      %s27 = ssub.s32 %s22, 1
      %s28 = ssub.s32 %s22, 2
      %s35 = sadd.s32 1, %s30
      %p36 = scmp.ge.s32.totalorder %s35, 3
      %s37 = scalar_select %p36, 0, %s35
      %s38 = sadd.s32 1, %s29
      %s39 = scalar_select %p36, %s38, %s29
      %p40 = scmp.ge.s32.totalorder %s39, 2
      %s41 = scalar_select %p40, 0, %s39
      %s42 = ssub.s32 %s30, %s37
      %s43 = ssub.s32 %s29, %s41
      %s44 = sor.u32 %s42, %s43
      %p45 = scmp.eq.s32.totalorder %s44, 0
      %s47 = sadd.s32 %s46, 1
      %s48 = scalar_select %p45, %s46, %s47
      %p51 = pneg %p45
      %p52 = scmp.eq.s32.totalorder %s22, 5
      %p53 = por %p51, %p52
      %p54 = scmp.ne.s32.totalorder %s46, %s49
      %p55 = scmp.eq.s32.totalorder %s22, 0
      %p56 = por %p54, %p55
      %p57 = scmp.ne.s32.totalorder %s46, %s49
      %p58 = scmp.eq.s32.totalorder %s27, 5
      %p59 = por %p57, %p58
      %p60 = scmp.ne.s32.totalorder %s49, %s50
      %p61 = scmp.eq.s32.totalorder %s27, 0
      %p62 = por %p60, %p61
      %p63 = scmp.ne.s32.totalorder %s49, %s50
      %p64 = scmp.eq.s32.totalorder %s28, 5
      %p65 = por %p63, %p64
      %p67 = scmp.ne.s32.totalorder %s50, %s66
      %p68 = scmp.eq.s32.totalorder %s28, 0
      %p69 = por %p67, %p68
      %s70 = ssub.s32 %s30, %s37
      %p71 = scmp.eq.s32.totalorder %s70, 0
      %s73 = sadd.s32 %s72, 1
      %s74 = scalar_select %p71, %s72, %s73
      %p77 = pneg %p71
      %p78 = scmp.eq.s32.totalorder %s22, 5
      %p79 = por %p77, %p78
      %p80 = scmp.ne.s32.totalorder %s72, %s75
      %p81 = scmp.eq.s32.totalorder %s22, 0
      %p82 = por %p80, %p81
      %p83 = scmp.ne.s32.totalorder %s72, %s75
      %p84 = scmp.eq.s32.totalorder %s27, 5
      %p85 = por %p83, %p84
      %p86 = scmp.ne.s32.totalorder %s75, %s76
      %p87 = scmp.eq.s32.totalorder %s27, 0
      %p88 = por %p86, %p87
      %p89 = scmp.ne.s32.totalorder %s75, %s76
      %p90 = scmp.eq.s32.totalorder %s28, 5
      %p91 = por %p89, %p90
      %p93 = scmp.ne.s32.totalorder %s76, %s92
      %p94 = scmp.eq.s32.totalorder %s28, 0
      %p95 = por %p93, %p94
      %s96 = ssub.s32 %s30, %s37
      %s97 = ssub.s32 %s29, %s41
      %s98 = sor.u32 %s96, %s97
      %p99 = scmp.eq.s32.totalorder %s98, 0
      %s101 = sadd.s32 %s100, 1
      %s102 = scalar_select %p99, %s100, %s101
      %p105 = pneg %p99
      %p106 = scmp.eq.s32.totalorder %s22, 5
      %p107 = por %p105, %p106
      %p108 = scmp.ne.s32.totalorder %s100, %s103
      %p109 = scmp.eq.s32.totalorder %s22, 0
      %p110 = por %p108, %p109
      %p111 = scmp.ne.s32.totalorder %s100, %s103
      %p112 = scmp.eq.s32.totalorder %s27, 5
      %p113 = por %p111, %p112
      %p114 = scmp.ne.s32.totalorder %s103, %s104
      %p115 = scmp.eq.s32.totalorder %s27, 0
      %p116 = por %p114, %p115
      %p117 = scmp.ne.s32.totalorder %s103, %s104
      %p118 = scmp.eq.s32.totalorder %s28, 5
      %p119 = por %p117, %p118
      %p121 = scmp.ne.s32.totalorder %s104, %s120
      %p122 = scmp.eq.s32.totalorder %s28, 0
      %p123 = por %p121, %p122
      %s124 = ssub.s32 %s30, %s37
      %s125 = ssub.s32 %s29, %s41
      %s126 = sor.u32 %s124, %s125
      %p127 = scmp.eq.s32.totalorder %s126, 0
      %s129 = sadd.s32 %s128, 1
      %s130 = scalar_select %p127, %s128, %s129
      %p133 = pneg %p127
      %p134 = scmp.eq.s32.totalorder %s22, 5
      %p135 = por %p133, %p134
      %p136 = scmp.ne.s32.totalorder %s128, %s131
      %p137 = scmp.eq.s32.totalorder %s22, 0
      %p138 = por %p136, %p137
      %p139 = scmp.ne.s32.totalorder %s128, %s131
      %p140 = scmp.eq.s32.totalorder %s27, 5
      %p141 = por %p139, %p140
      %p142 = scmp.ne.s32.totalorder %s131, %s132
      %p143 = scmp.eq.s32.totalorder %s27, 0
      %p144 = por %p142, %p143
      %p145 = scmp.ne.s32.totalorder %s131, %s132
      %p146 = scmp.eq.s32.totalorder %s28, 5
      %p147 = por %p145, %p146
      %p149 = scmp.ne.s32.totalorder %s132, %s148
      %p150 = scmp.eq.s32.totalorder %s28, 0
      %p151 = por %p149, %p150
      %p152 = scmp.le.s32.totalorder 1, %s22
      %p153 = scmp.lt.s32.totalorder %s22, 7
      %p154 = pnand %p152, %p153
      %p155 = pneg %p154
      // Predicated region
      $region9: #{tpu_custom_call.1} parent=5 // pred_check
        _
      $region10: #{tpu_custom_call.1} parent=5 // pred_check_branch
        %157 = sbr.rel (%p154) target = $region12
      $region11: #{tpu_custom_call.1} parent=5 // pred_region
        %s158 = ssub.s32 %s22, 1
      $region12: #{tpu_custom_call.1} parent=5 // pred_fallthru
        _
      %p159 = scmp.lt.s32.totalorder %s22, 6
      // Predicated region
      $region13: #{tpu_custom_call.1} parent=5 // pred_check
        %p160 = pneg %p159
      $region14: #{tpu_custom_call.1} parent=5 // pred_check_branch
        %162 = sbr.rel (%p160) target = $region16
      $region15: #{tpu_custom_call.1} parent=5 // pred_region
        // Predicated region
        $region17: #{tpu_custom_call.1} parent=15 // pred_check
          %p163 = pneg %p56
        $region18: #{tpu_custom_call.1} parent=15 // pred_check_branch
          %165 = sbr.rel (%p163) target = $region20
        $region19: #{tpu_custom_call.1} parent=15 // pred_region
          %s166 = sand.u32 %s46, 1
          %s167 = scalar_lea.sflag [#allocation5], %s166
          %s168 = sand.u32 %s46, 1
          %s169 = smul.addr %s168, 8
          %s170 = scalar_lea.vmem [#allocation4], %s169
          %s172 = ssub.s32 128, 128
          %173 = vsyncadd %s167, %s172
          %s174 = smul.addr %s30, 2
          %s175 = sadd.s32 %s29, %s174
          %s176 = smul.addr %s175, 128
          %s177 = scalar_lea.hbm %s0, %s176
          %s179 = sshll.u32 %s170, 4
          %s180 = int_to_ptr.vmem [resolvable:$true] %s179
          %182 = dma.hbm_to_vmem [thread:$0]  %s177, 128, %s180, %s167
        $region20: #{tpu_custom_call.1} parent=15 // pred_fallthru
          _
        // Predicated region
        $region21: #{tpu_custom_call.1} parent=15 // pred_check
          %p183 = pneg %p82
        $region22: #{tpu_custom_call.1} parent=15 // pred_check_branch
          %185 = sbr.rel (%p183) target = $region24
        $region23: #{tpu_custom_call.1} parent=15 // pred_region
          %s186 = sand.u32 %s72, 1
          %s187 = scalar_lea.sflag [#allocation8], %s186
          %s188 = sand.u32 %s72, 1
          %s189 = smul.addr %s188, 8
          %s190 = scalar_lea.vmem [#allocation7], %s189
          %s192 = ssub.s32 128, 128
          %193 = vsyncadd %s187, %s192
          %s194 = smul.addr %s30, 128
          %s195 = scalar_lea.hbm %s1, %s194
          %s197 = sshll.u32 %s190, 4
          %s198 = int_to_ptr.vmem [resolvable:$true] %s197
          %200 = dma.hbm_to_vmem [thread:$0]  %s195, 128, %s198, %s187
        $region24: #{tpu_custom_call.1} parent=15 // pred_fallthru
          _
      $region16: #{tpu_custom_call.1} parent=5 // pred_fallthru
        _
      %p201 = scmp.le.s32.totalorder 1, %s22
      %p202 = scmp.lt.s32.totalorder %s22, 7
      %p203 = pnand %p201, %p202
      %p204 = pneg %p203
      // Predicated region
      $region25: #{tpu_custom_call.1} parent=5 // pred_check
        _
      $region26: #{tpu_custom_call.1} parent=5 // pred_check_branch
        %206 = sbr.rel (%p203) target = $region28
      $region27: #{tpu_custom_call.1} parent=5 // pred_region
        %s207 = ssub.s32 %s22, 1
        %s208 = sand.u32 %s49, 1
        %s209 = scalar_lea.sflag [#allocation5], %s208
        %s210 = sand.u32 %s49, 1
        %s211 = smul.addr %s210, 8
        %s212 = scalar_lea.vmem [#allocation4], %s211
        // Predicated region
        $region29: #{tpu_custom_call.1} parent=27 // pred_check
          %p213 = pneg %p62
        $region30: #{tpu_custom_call.1} parent=27 // pred_check_branch
          %215 = sbr.rel (%p213) target = $region32
        $region31: #{tpu_custom_call.1} parent=27 // pred_region
          %216 = dma.done %s209, 128
        $region32: #{tpu_custom_call.1} parent=27 // pred_fallthru
          _
        %s217 = sand.u32 %s75, 1
        %s218 = scalar_lea.sflag [#allocation8], %s217
        %s219 = sand.u32 %s75, 1
        %s220 = smul.addr %s219, 8
        %s221 = scalar_lea.vmem [#allocation7], %s220
        // Predicated region
        $region33: #{tpu_custom_call.1} parent=27 // pred_check
          %p222 = pneg %p88
        $region34: #{tpu_custom_call.1} parent=27 // pred_check_branch
          %224 = sbr.rel (%p222) target = $region36
        $region35: #{tpu_custom_call.1} parent=27 // pred_region
          %225 = dma.done %s218, 128
        $region36: #{tpu_custom_call.1} parent=27 // pred_fallthru
          _
        %s226 = sand.u32 %s49, 1
        %s227 = scalar_lea.sflag [#allocation5], %s226
        %s228 = sand.u32 %s49, 1
        %s229 = smul.addr %s228, 8
        %s230 = scalar_lea.vmem [#allocation4], %s229
        %p231 = pneg %p62
        %p232 = pneg %p59
        %s233 = sand.u32 %s75, 1
        %s234 = scalar_lea.sflag [#allocation8], %s233
        %s235 = sand.u32 %s75, 1
        %s236 = smul.addr %s235, 8
        %s237 = scalar_lea.vmem [#allocation7], %s236
        %p238 = pneg %p88
        %p239 = pneg %p85
        %p240 = pneg %p116
        %p241 = pneg %p113
        %s242 = sand.u32 %s103, 1
        %s243 = scalar_lea.sflag [#allocation6], %s242
        %s244 = sand.u32 %s103, 1
        %s245 = smul.addr %s244, 8
        %s246 = scalar_lea.vmem [#allocation9], %s245
        %p247 = pneg %p144
        %p248 = pneg %p141
        %s249 = sand.u32 %s131, 1
        %s250 = scalar_lea.sflag [#allocation11], %s249
        %s251 = sand.u32 %s131, 1
        %s252 = smul.addr %s251, 8
        %s253 = scalar_lea.vmem [#allocation10], %s252
        %s254 = smul.u32 %s32, 8
        %p255 = scmp.eq.s32.totalorder %s32, 0
        // Predicated region
        $region37: #{tpu_custom_call.1} parent=27 // pred_check
          %p256 = pneg %p255
        $region38: #{tpu_custom_call.1} parent=27 // pred_check_branch
          %258 = sbr.rel (%p256) target = $region40
        $region39: #{tpu_custom_call.1} parent=27 // pred_region
          %259 = vst [vmem:[#allocation3] sm:$0xff] 0.0
          %260 = vst [vmem:[#allocation3 + $0x8] sm:$0xff] 0.0
          %261 = vst [vmem:[#allocation3 + $0x10] sm:$0xff] 0.0
          %262 = vst [vmem:[#allocation3 + $0x18] sm:$0xff] 0.0
          %263 = vst [vmem:[#allocation3 + $0x20] sm:$0xff] 0.0
          %264 = vst [vmem:[#allocation3 + $0x28] sm:$0xff] 0.0
          %265 = vst [vmem:[#allocation3 + $0x30] sm:$0xff] 0.0
          %266 = vst [vmem:[#allocation3 + $0x38] sm:$0xff] 0.0
          %267 = vst [vmem:[#allocation3 + $0x40] sm:$0xff] 0.0
          %268 = vst [vmem:[#allocation3 + $0x48] sm:$0xff] 0.0
          %269 = vst [vmem:[#allocation3 + $0x50] sm:$0xff] 0.0
          %270 = vst [vmem:[#allocation3 + $0x58] sm:$0xff] 0.0
          %271 = vst [vmem:[#allocation3 + $0x60] sm:$0xff] 0.0
          %272 = vst [vmem:[#allocation3 + $0x68] sm:$0xff] 0.0
          %273 = vst [vmem:[#allocation3 + $0x70] sm:$0xff] 0.0
          %274 = vst [vmem:[#allocation3 + $0x78] sm:$0xff] 0.0
          %275 = vst [vmem:[#allocation2] sm:$0x1] -70.0
        $region40: #{tpu_custom_call.1} parent=27 // pred_fallthru
          _
        %v276 = vld [vmem:[%s221] sm:$0xff]
        %v277 = vld [vmem:[#allocation3] sm:$0xff]
        %v278 = vld [vmem:[#allocation3 + $0x8] sm:$0xff]
        %v279 = vld [vmem:[#allocation3 + $0x10] sm:$0xff]
        %v280 = vld [vmem:[#allocation3 + $0x18] sm:$0xff]
        %v281 = vld [vmem:[#allocation3 + $0x20] sm:$0xff]
        %v282 = vld [vmem:[#allocation3 + $0x28] sm:$0xff]
        %v283 = vld [vmem:[#allocation3 + $0x30] sm:$0xff]
        %v284 = vld [vmem:[#allocation3 + $0x38] sm:$0xff]
        %v285 = vld [vmem:[#allocation3 + $0x40] sm:$0xff]
        %v286 = vld [vmem:[#allocation3 + $0x48] sm:$0xff]
        %v287 = vld [vmem:[#allocation3 + $0x50] sm:$0xff]
        %v288 = vld [vmem:[#allocation3 + $0x58] sm:$0xff]
        %v289 = vld [vmem:[#allocation3 + $0x60] sm:$0xff]
        %v290 = vld [vmem:[#allocation3 + $0x68] sm:$0xff]
        %v291 = vld [vmem:[#allocation3 + $0x70] sm:$0xff]
        %v292 = vld [vmem:[#allocation3 + $0x78] sm:$0xff]
        %293 = vmatprep.subr.mxu0 0.0
        %v294 = vand.u32 %v277, 4294901760
        %295 = vmatpush1.msra.mxu0 %v294
        %296 = vmatprep.subr.mxu0 0.0
        %v297 = vand.u32 %v278, 4294901760
        %298 = vmatpush1.msra.mxu0 %v297
        %299 = vmatprep.subr.mxu0 0.0
        %v300 = vand.u32 %v279, 4294901760
        %301 = vmatpush1.msra.mxu0 %v300
        %302 = vmatprep.subr.mxu0 0.0
        %v303 = vand.u32 %v280, 4294901760
        %304 = vmatpush1.msra.mxu0 %v303
        %305 = vmatprep.subr.mxu0 0.0
        %v306 = vand.u32 %v281, 4294901760
        %307 = vmatpush1.msra.mxu0 %v306
        %308 = vmatprep.subr.mxu0 0.0
        %v309 = vand.u32 %v282, 4294901760
        %310 = vmatpush1.msra.mxu0 %v309
        %311 = vmatprep.subr.mxu0 0.0
        %v312 = vand.u32 %v283, 4294901760
        %313 = vmatpush1.msra.mxu0 %v312
        %314 = vmatprep.subr.mxu0 0.0
        %v315 = vand.u32 %v284, 4294901760
        %316 = vmatpush1.msra.mxu0 %v315
        %317 = vmatprep.subr.mxu0 0.0
        %v318 = vand.u32 %v285, 4294901760
        %319 = vmatpush1.msra.mxu0 %v318
        %320 = vmatprep.subr.mxu0 0.0
        %v321 = vand.u32 %v286, 4294901760
        %322 = vmatpush1.msra.mxu0 %v321
        %323 = vmatprep.subr.mxu0 0.0
        %v324 = vand.u32 %v287, 4294901760
        %325 = vmatpush1.msra.mxu0 %v324
        %326 = vmatprep.subr.mxu0 0.0
        %v327 = vand.u32 %v288, 4294901760
        %328 = vmatpush1.msra.mxu0 %v327
        %329 = vmatprep.subr.mxu0 0.0
        %v330 = vand.u32 %v289, 4294901760
        %331 = vmatpush1.msra.mxu0 %v330
        %332 = vmatprep.subr.mxu0 0.0
        %v333 = vand.u32 %v290, 4294901760
        %334 = vmatpush1.msra.mxu0 %v333
        %335 = vmatprep.subr.mxu0 0.0
        %v336 = vand.u32 %v291, 4294901760
        %337 = vmatpush1.msra.mxu0 %v336
        %338 = vmatprep.subr.mxu0 0.0
        %v339 = vand.u32 %v292, 4294901760
        %340 = vmatpush1.msra.mxu0 %v339
        %341 = vmatprep.subr.mxu0 0.0
        %342 = vmatpush1.msra.mxu0 0.0
        %343 = vmatprep.subr.mxu0 0.0
        %344 = vmatpush1.msra.mxu0 0.0
        %345 = vmatprep.subr.mxu0 0.0
        %346 = vmatpush1.msra.mxu0 0.0
        %347 = vmatprep.subr.mxu0 0.0
        %348 = vmatpush1.msra.mxu0 0.0
        %349 = vmatprep.subr.mxu0 0.0
        %350 = vmatpush1.msra.mxu0 0.0
        %351 = vmatprep.subr.mxu0 0.0
        %352 = vmatpush1.msra.mxu0 0.0
        %353 = vmatprep.subr.mxu0 0.0
        %354 = vmatpush1.msra.mxu0 0.0
        %355 = vmatprep.subr.mxu0 0.0
        %356 = vmatpush1.msra.mxu0 0.0
        %357 = vmatprep.subr.mxu0 0.0
        %358 = vmatpush1.msra.mxu0 0.0
        %359 = vmatprep.subr.mxu0 0.0
        %360 = vmatpush1.msra.mxu0 0.0
        %361 = vmatprep.subr.mxu0 0.0
        %362 = vmatpush1.msra.mxu0 0.0
        %363 = vmatprep.subr.mxu0 0.0
        %364 = vmatpush1.msra.mxu0 0.0
        %365 = vmatprep.subr.mxu0 0.0
        %366 = vmatpush1.msra.mxu0 0.0
        %367 = vmatprep.subr.mxu0 0.0
        %368 = vmatpush1.msra.mxu0 0.0
        %369 = vmatprep.subr.mxu0 0.0
        %370 = vmatpush1.msra.mxu0 0.0
        %371 = vmatprep.subr.mxu0 0.0
        %372 = vmatpush1.msra.mxu0 0.0
        %373 = vmatprep.mubr.f32.mxu0 0.0
        %v374 = vand.u32 %v276, 4294901760
        %v375 = vsub.f32 %v276, %v374
        %v376 = vand.u32 %v375, 4294901760
        %v377 = vsub.f32 %v375, %v376
        %v378 = vand.u32 %v377, 4294901760
        %379 = vmatmul.mubr.f32.gmra.mrb[0].mxu0 %v378
        %v380 = vpop.f32.mrb[0].mxu0
        %v381 = vadd.f32 0.0, %v380
        %v382 = vpop.f32.mrb[0].mxu0
        %383 = vdwg.mxu0
        %384 = vmatprep.subr.mxu0 0.0
        %v385 = vand.u32 %v277, 4294901760
        %v386 = vsub.f32 %v277, %v385
        %v387 = vand.u32 %v386, 4294901760
        %v388 = vsub.f32 %v386, %v387
        %v389 = vand.u32 %v388, 4294901760
        %390 = vmatpush1.msra.mxu0 %v389
        %391 = vmatprep.subr.mxu0 0.0
        %v392 = vand.u32 %v278, 4294901760
        %v393 = vsub.f32 %v278, %v392
        %v394 = vand.u32 %v393, 4294901760
        %v395 = vsub.f32 %v393, %v394
        %v396 = vand.u32 %v395, 4294901760
        %397 = vmatpush1.msra.mxu0 %v396
        %398 = vmatprep.subr.mxu0 0.0
        %v399 = vand.u32 %v279, 4294901760
        %v400 = vsub.f32 %v279, %v399
        %v401 = vand.u32 %v400, 4294901760
        %v402 = vsub.f32 %v400, %v401
        %v403 = vand.u32 %v402, 4294901760
        %404 = vmatpush1.msra.mxu0 %v403
        %405 = vmatprep.subr.mxu0 0.0
        %v406 = vand.u32 %v280, 4294901760
        %v407 = vsub.f32 %v280, %v406
        %v408 = vand.u32 %v407, 4294901760
        %v409 = vsub.f32 %v407, %v408
        %v410 = vand.u32 %v409, 4294901760
        %411 = vmatpush1.msra.mxu0 %v410
        %412 = vmatprep.subr.mxu0 0.0
        %v413 = vand.u32 %v281, 4294901760
        %v414 = vsub.f32 %v281, %v413
        %v415 = vand.u32 %v414, 4294901760
        %v416 = vsub.f32 %v414, %v415
        %v417 = vand.u32 %v416, 4294901760
        %418 = vmatpush1.msra.mxu0 %v417
        %419 = vmatprep.subr.mxu0 0.0
        %v420 = vand.u32 %v282, 4294901760
        %v421 = vsub.f32 %v282, %v420
        %v422 = vand.u32 %v421, 4294901760
        %v423 = vsub.f32 %v421, %v422
        %v424 = vand.u32 %v423, 4294901760
        %425 = vmatpush1.msra.mxu0 %v424
        %426 = vmatprep.subr.mxu0 0.0
        %v427 = vand.u32 %v283, 4294901760
        %v428 = vsub.f32 %v283, %v427
        %v429 = vand.u32 %v428, 4294901760
        %v430 = vsub.f32 %v428, %v429
        %v431 = vand.u32 %v430, 4294901760
        %432 = vmatpush1.msra.mxu0 %v431
        %433 = vmatprep.subr.mxu0 0.0
        %v434 = vand.u32 %v284, 4294901760
        %v435 = vsub.f32 %v284, %v434
        %v436 = vand.u32 %v435, 4294901760
        %v437 = vsub.f32 %v435, %v436
        %v438 = vand.u32 %v437, 4294901760
        %439 = vmatpush1.msra.mxu0 %v438
        %440 = vmatprep.subr.mxu0 0.0
        %v441 = vand.u32 %v285, 4294901760
        %v442 = vsub.f32 %v285, %v441
        %v443 = vand.u32 %v442, 4294901760
        %v444 = vsub.f32 %v442, %v443
        %v445 = vand.u32 %v444, 4294901760
        %446 = vmatpush1.msra.mxu0 %v445
        %447 = vmatprep.subr.mxu0 0.0
        %v448 = vand.u32 %v286, 4294901760
        %v449 = vsub.f32 %v286, %v448
        %v450 = vand.u32 %v449, 4294901760
        %v451 = vsub.f32 %v449, %v450
        %v452 = vand.u32 %v451, 4294901760
        %453 = vmatpush1.msra.mxu0 %v452
        %454 = vmatprep.subr.mxu0 0.0
        %v455 = vand.u32 %v287, 4294901760
        %v456 = vsub.f32 %v287, %v455
        %v457 = vand.u32 %v456, 4294901760
        %v458 = vsub.f32 %v456, %v457
        %v459 = vand.u32 %v458, 4294901760
        %460 = vmatpush1.msra.mxu0 %v459
        %461 = vmatprep.subr.mxu0 0.0
        %v462 = vand.u32 %v288, 4294901760
        %v463 = vsub.f32 %v288, %v462
        %v464 = vand.u32 %v463, 4294901760
        %v465 = vsub.f32 %v463, %v464
        %v466 = vand.u32 %v465, 4294901760
        %467 = vmatpush1.msra.mxu0 %v466
        %468 = vmatprep.subr.mxu0 0.0
        %v469 = vand.u32 %v289, 4294901760
        %v470 = vsub.f32 %v289, %v469
        %v471 = vand.u32 %v470, 4294901760
        %v472 = vsub.f32 %v470, %v471
        %v473 = vand.u32 %v472, 4294901760
        %474 = vmatpush1.msra.mxu0 %v473
        %475 = vmatprep.subr.mxu0 0.0
        %v476 = vand.u32 %v290, 4294901760
        %v477 = vsub.f32 %v290, %v476
        %v478 = vand.u32 %v477, 4294901760
        %v479 = vsub.f32 %v477, %v478
        %v480 = vand.u32 %v479, 4294901760
        %481 = vmatpush1.msra.mxu0 %v480
        %482 = vmatprep.subr.mxu0 0.0
        %v483 = vand.u32 %v291, 4294901760
        %v484 = vsub.f32 %v291, %v483
        %v485 = vand.u32 %v484, 4294901760
        %v486 = vsub.f32 %v484, %v485
        %v487 = vand.u32 %v486, 4294901760
        %488 = vmatpush1.msra.mxu0 %v487
        %489 = vmatprep.subr.mxu0 0.0
        %v490 = vand.u32 %v292, 4294901760
        %v491 = vsub.f32 %v292, %v490
        %v492 = vand.u32 %v491, 4294901760
        %v493 = vsub.f32 %v491, %v492
        %v494 = vand.u32 %v493, 4294901760
        %495 = vmatpush1.msra.mxu0 %v494
        %496 = vmatprep.subr.mxu0 0.0
        %497 = vmatpush1.msra.mxu0 0.0
        %498 = vmatprep.subr.mxu0 0.0
        %499 = vmatpush1.msra.mxu0 0.0
        %500 = vmatprep.subr.mxu0 0.0
        %501 = vmatpush1.msra.mxu0 0.0
        %502 = vmatprep.subr.mxu0 0.0
        %503 = vmatpush1.msra.mxu0 0.0
        %504 = vmatprep.subr.mxu0 0.0
        %505 = vmatpush1.msra.mxu0 0.0
        %506 = vmatprep.subr.mxu0 0.0
        %507 = vmatpush1.msra.mxu0 0.0
        %508 = vmatprep.subr.mxu0 0.0
        %509 = vmatpush1.msra.mxu0 0.0
        %510 = vmatprep.subr.mxu0 0.0
        %511 = vmatpush1.msra.mxu0 0.0
        %512 = vmatprep.subr.mxu0 0.0
        %513 = vmatpush1.msra.mxu0 0.0
        %514 = vmatprep.subr.mxu0 0.0
        %515 = vmatpush1.msra.mxu0 0.0
        %516 = vmatprep.subr.mxu0 0.0
        %517 = vmatpush1.msra.mxu0 0.0
        %518 = vmatprep.subr.mxu0 0.0
        %519 = vmatpush1.msra.mxu0 0.0
        %520 = vmatprep.subr.mxu0 0.0
        %521 = vmatpush1.msra.mxu0 0.0
        %522 = vmatprep.subr.mxu0 0.0
        %523 = vmatpush1.msra.mxu0 0.0
        %524 = vmatprep.subr.mxu0 0.0
        %525 = vmatpush1.msra.mxu0 0.0
        %526 = vmatprep.subr.mxu0 0.0
        %527 = vmatpush1.msra.mxu0 0.0
        %528 = vmatprep.mubr.f32.mxu0 0.0
        %v529 = vand.u32 %v276, 4294901760
        %530 = vmatmul.mubr.f32.gmra.mrb[0].mxu0 %v529
        %v531 = vpop.f32.mrb[0].mxu0
        %v532 = vadd.f32 %v381, %v531
        %v533 = vpop.f32.mrb[0].mxu0
        %534 = vdwg.mxu0
        %535 = vmatprep.subr.mxu0 0.0
        %v536 = vand.u32 %v277, 4294901760
        %v537 = vsub.f32 %v277, %v536
        %538 = vmatpush1.msra.mxu0 %v537
        %539 = vmatprep.subr.mxu0 0.0
        %v540 = vand.u32 %v278, 4294901760
        %v541 = vsub.f32 %v278, %v540
        %542 = vmatpush1.msra.mxu0 %v541
        %543 = vmatprep.subr.mxu0 0.0
        %v544 = vand.u32 %v279, 4294901760
        %v545 = vsub.f32 %v279, %v544
        %546 = vmatpush1.msra.mxu0 %v545
        %547 = vmatprep.subr.mxu0 0.0
        %v548 = vand.u32 %v280, 4294901760
        %v549 = vsub.f32 %v280, %v548
        %550 = vmatpush1.msra.mxu0 %v549
        %551 = vmatprep.subr.mxu0 0.0
        %v552 = vand.u32 %v281, 4294901760
        %v553 = vsub.f32 %v281, %v552
        %554 = vmatpush1.msra.mxu0 %v553
        %555 = vmatprep.subr.mxu0 0.0
        %v556 = vand.u32 %v282, 4294901760
        %v557 = vsub.f32 %v282, %v556
        %558 = vmatpush1.msra.mxu0 %v557
        %559 = vmatprep.subr.mxu0 0.0
        %v560 = vand.u32 %v283, 4294901760
        %v561 = vsub.f32 %v283, %v560
        %562 = vmatpush1.msra.mxu0 %v561
        %563 = vmatprep.subr.mxu0 0.0
        %v564 = vand.u32 %v284, 4294901760
        %v565 = vsub.f32 %v284, %v564
        %566 = vmatpush1.msra.mxu0 %v565
        %567 = vmatprep.subr.mxu0 0.0
        %v568 = vand.u32 %v285, 4294901760
        %v569 = vsub.f32 %v285, %v568
        %570 = vmatpush1.msra.mxu0 %v569
        %571 = vmatprep.subr.mxu0 0.0
        %v572 = vand.u32 %v286, 4294901760
        %v573 = vsub.f32 %v286, %v572
        %574 = vmatpush1.msra.mxu0 %v573
        %575 = vmatprep.subr.mxu0 0.0
        %v576 = vand.u32 %v287, 4294901760
        %v577 = vsub.f32 %v287, %v576
        %578 = vmatpush1.msra.mxu0 %v577
        %579 = vmatprep.subr.mxu0 0.0
        %v580 = vand.u32 %v288, 4294901760
        %v581 = vsub.f32 %v288, %v580
        %582 = vmatpush1.msra.mxu0 %v581
        %583 = vmatprep.subr.mxu0 0.0
        %v584 = vand.u32 %v289, 4294901760
        %v585 = vsub.f32 %v289, %v584
        %586 = vmatpush1.msra.mxu0 %v585
        %587 = vmatprep.subr.mxu0 0.0
        %v588 = vand.u32 %v290, 4294901760
        %v589 = vsub.f32 %v290, %v588
        %590 = vmatpush1.msra.mxu0 %v589
        %591 = vmatprep.subr.mxu0 0.0
        %v592 = vand.u32 %v291, 4294901760
        %v593 = vsub.f32 %v291, %v592
        %594 = vmatpush1.msra.mxu0 %v593
        %595 = vmatprep.subr.mxu0 0.0
        %v596 = vand.u32 %v292, 4294901760
        %v597 = vsub.f32 %v292, %v596
        %598 = vmatpush1.msra.mxu0 %v597
        %599 = vmatprep.subr.mxu0 0.0
        %600 = vmatpush1.msra.mxu0 0.0
        %601 = vmatprep.subr.mxu0 0.0
        %602 = vmatpush1.msra.mxu0 0.0
        %603 = vmatprep.subr.mxu0 0.0
        %604 = vmatpush1.msra.mxu0 0.0
        %605 = vmatprep.subr.mxu0 0.0
        %606 = vmatpush1.msra.mxu0 0.0
        %607 = vmatprep.subr.mxu0 0.0
        %608 = vmatpush1.msra.mxu0 0.0
        %609 = vmatprep.subr.mxu0 0.0
        %610 = vmatpush1.msra.mxu0 0.0
        %611 = vmatprep.subr.mxu0 0.0
        %612 = vmatpush1.msra.mxu0 0.0
        %613 = vmatprep.subr.mxu0 0.0
        %614 = vmatpush1.msra.mxu0 0.0
        %615 = vmatprep.subr.mxu0 0.0
        %616 = vmatpush1.msra.mxu0 0.0
        %617 = vmatprep.subr.mxu0 0.0
        %618 = vmatpush1.msra.mxu0 0.0
        %619 = vmatprep.subr.mxu0 0.0
        %620 = vmatpush1.msra.mxu0 0.0
        %621 = vmatprep.subr.mxu0 0.0
        %622 = vmatpush1.msra.mxu0 0.0
        %623 = vmatprep.subr.mxu0 0.0
        %624 = vmatpush1.msra.mxu0 0.0
        %625 = vmatprep.subr.mxu0 0.0
        %626 = vmatpush1.msra.mxu0 0.0
        %627 = vmatprep.subr.mxu0 0.0
        %628 = vmatpush1.msra.mxu0 0.0
        %629 = vmatprep.subr.mxu0 0.0
        %630 = vmatpush1.msra.mxu0 0.0
        %631 = vmatprep.mubr.f32.mxu0 0.0
        %v632 = vand.u32 %v276, 4294901760
        %v633 = vsub.f32 %v276, %v632
        %634 = vmatmul.mubr.f32.gmra.mrb[0].mxu0 %v633
        %v635 = vpop.f32.mrb[0].mxu0
        %v636 = vadd.f32 %v532, %v635
        %v637 = vpop.f32.mrb[0].mxu0
        %638 = vdwg.mxu0
        %639 = vmatprep.subr.mxu0 0.0
        %v640 = vand.u32 %v277, 4294901760
        %641 = vmatpush1.msra.mxu0 %v640
        %642 = vmatprep.subr.mxu0 0.0
        %v643 = vand.u32 %v278, 4294901760
        %644 = vmatpush1.msra.mxu0 %v643
        %645 = vmatprep.subr.mxu0 0.0
        %v646 = vand.u32 %v279, 4294901760
        %647 = vmatpush1.msra.mxu0 %v646
        %648 = vmatprep.subr.mxu0 0.0
        %v649 = vand.u32 %v280, 4294901760
        %650 = vmatpush1.msra.mxu0 %v649
        %651 = vmatprep.subr.mxu0 0.0
        %v652 = vand.u32 %v281, 4294901760
        %653 = vmatpush1.msra.mxu0 %v652
        %654 = vmatprep.subr.mxu0 0.0
        %v655 = vand.u32 %v282, 4294901760
        %656 = vmatpush1.msra.mxu0 %v655
        %657 = vmatprep.subr.mxu0 0.0
        %v658 = vand.u32 %v283, 4294901760
        %659 = vmatpush1.msra.mxu0 %v658
        %660 = vmatprep.subr.mxu0 0.0
        %v661 = vand.u32 %v284, 4294901760
        %662 = vmatpush1.msra.mxu0 %v661
        %663 = vmatprep.subr.mxu0 0.0
        %v664 = vand.u32 %v285, 4294901760
        %665 = vmatpush1.msra.mxu0 %v664
        %666 = vmatprep.subr.mxu0 0.0
        %v667 = vand.u32 %v286, 4294901760
        %668 = vmatpush1.msra.mxu0 %v667
        %669 = vmatprep.subr.mxu0 0.0
        %v670 = vand.u32 %v287, 4294901760
        %671 = vmatpush1.msra.mxu0 %v670
        %672 = vmatprep.subr.mxu0 0.0
        %v673 = vand.u32 %v288, 4294901760
        %674 = vmatpush1.msra.mxu0 %v673
        %675 = vmatprep.subr.mxu0 0.0
        %v676 = vand.u32 %v289, 4294901760
        %677 = vmatpush1.msra.mxu0 %v676
        %678 = vmatprep.subr.mxu0 0.0
        %v679 = vand.u32 %v290, 4294901760
        %680 = vmatpush1.msra.mxu0 %v679
        %681 = vmatprep.subr.mxu0 0.0
        %v682 = vand.u32 %v291, 4294901760
        %683 = vmatpush1.msra.mxu0 %v682
        %684 = vmatprep.subr.mxu0 0.0
        %v685 = vand.u32 %v292, 4294901760
        %686 = vmatpush1.msra.mxu0 %v685
        %687 = vmatprep.subr.mxu0 0.0
        %688 = vmatpush1.msra.mxu0 0.0
        %689 = vmatprep.subr.mxu0 0.0
        %690 = vmatpush1.msra.mxu0 0.0
        %691 = vmatprep.subr.mxu0 0.0
        %692 = vmatpush1.msra.mxu0 0.0
        %693 = vmatprep.subr.mxu0 0.0
        %694 = vmatpush1.msra.mxu0 0.0
        %695 = vmatprep.subr.mxu0 0.0
        %696 = vmatpush1.msra.mxu0 0.0
        %697 = vmatprep.subr.mxu0 0.0
        %698 = vmatpush1.msra.mxu0 0.0
        %699 = vmatprep.subr.mxu0 0.0
        %700 = vmatpush1.msra.mxu0 0.0
        %701 = vmatprep.subr.mxu0 0.0
        %702 = vmatpush1.msra.mxu0 0.0
        %703 = vmatprep.subr.mxu0 0.0
        %704 = vmatpush1.msra.mxu0 0.0
        %705 = vmatprep.subr.mxu0 0.0
        %706 = vmatpush1.msra.mxu0 0.0
        %707 = vmatprep.subr.mxu0 0.0
        %708 = vmatpush1.msra.mxu0 0.0
        %709 = vmatprep.subr.mxu0 0.0
        %710 = vmatpush1.msra.mxu0 0.0
        %711 = vmatprep.subr.mxu0 0.0
        %712 = vmatpush1.msra.mxu0 0.0
        %713 = vmatprep.subr.mxu0 0.0
        %714 = vmatpush1.msra.mxu0 0.0
        %715 = vmatprep.subr.mxu0 0.0
        %716 = vmatpush1.msra.mxu0 0.0
        %717 = vmatprep.subr.mxu0 0.0
        %718 = vmatpush1.msra.mxu0 0.0
        %719 = vmatprep.mubr.f32.mxu0 0.0
        %v720 = vand.u32 %v276, 4294901760
        %v721 = vsub.f32 %v276, %v720
        %v722 = vand.u32 %v721, 4294901760
        %723 = vmatmul.mubr.f32.gmra.mrb[0].mxu0 %v722
        %v724 = vpop.f32.mrb[0].mxu0
        %v725 = vadd.f32 %v636, %v724
        %v726 = vpop.f32.mrb[0].mxu0
        %727 = vdwg.mxu0
        %728 = vmatprep.subr.mxu0 0.0
        %v729 = vand.u32 %v277, 4294901760
        %v730 = vsub.f32 %v277, %v729
        %v731 = vand.u32 %v730, 4294901760
        %732 = vmatpush1.msra.mxu0 %v731
        %733 = vmatprep.subr.mxu0 0.0
        %v734 = vand.u32 %v278, 4294901760
        %v735 = vsub.f32 %v278, %v734
        %v736 = vand.u32 %v735, 4294901760
        %737 = vmatpush1.msra.mxu0 %v736
        %738 = vmatprep.subr.mxu0 0.0
        %v739 = vand.u32 %v279, 4294901760
        %v740 = vsub.f32 %v279, %v739
        %v741 = vand.u32 %v740, 4294901760
        %742 = vmatpush1.msra.mxu0 %v741
        %743 = vmatprep.subr.mxu0 0.0
        %v744 = vand.u32 %v280, 4294901760
        %v745 = vsub.f32 %v280, %v744
        %v746 = vand.u32 %v745, 4294901760
        %747 = vmatpush1.msra.mxu0 %v746
        %748 = vmatprep.subr.mxu0 0.0
        %v749 = vand.u32 %v281, 4294901760
        %v750 = vsub.f32 %v281, %v749
        %v751 = vand.u32 %v750, 4294901760
        %752 = vmatpush1.msra.mxu0 %v751
        %753 = vmatprep.subr.mxu0 0.0
        %v754 = vand.u32 %v282, 4294901760
        %v755 = vsub.f32 %v282, %v754
        %v756 = vand.u32 %v755, 4294901760
        %757 = vmatpush1.msra.mxu0 %v756
        %758 = vmatprep.subr.mxu0 0.0
        %v759 = vand.u32 %v283, 4294901760
        %v760 = vsub.f32 %v283, %v759
        %v761 = vand.u32 %v760, 4294901760
        %762 = vmatpush1.msra.mxu0 %v761
        %763 = vmatprep.subr.mxu0 0.0
        %v764 = vand.u32 %v284, 4294901760
        %v765 = vsub.f32 %v284, %v764
        %v766 = vand.u32 %v765, 4294901760
        %767 = vmatpush1.msra.mxu0 %v766
        %768 = vmatprep.subr.mxu0 0.0
        %v769 = vand.u32 %v285, 4294901760
        %v770 = vsub.f32 %v285, %v769
        %v771 = vand.u32 %v770, 4294901760
        %772 = vmatpush1.msra.mxu0 %v771
        %773 = vmatprep.subr.mxu0 0.0
        %v774 = vand.u32 %v286, 4294901760
        %v775 = vsub.f32 %v286, %v774
        %v776 = vand.u32 %v775, 4294901760
        %777 = vmatpush1.msra.mxu0 %v776
        %778 = vmatprep.subr.mxu0 0.0
        %v779 = vand.u32 %v287, 4294901760
        %v780 = vsub.f32 %v287, %v779
        %v781 = vand.u32 %v780, 4294901760
        %782 = vmatpush1.msra.mxu0 %v781
        %783 = vmatprep.subr.mxu0 0.0
        %v784 = vand.u32 %v288, 4294901760
        %v785 = vsub.f32 %v288, %v784
        %v786 = vand.u32 %v785, 4294901760
        %787 = vmatpush1.msra.mxu0 %v786
        %788 = vmatprep.subr.mxu0 0.0
        %v789 = vand.u32 %v289, 4294901760
        %v790 = vsub.f32 %v289, %v789
        %v791 = vand.u32 %v790, 4294901760
        %792 = vmatpush1.msra.mxu0 %v791
        %793 = vmatprep.subr.mxu0 0.0
        %v794 = vand.u32 %v290, 4294901760
        %v795 = vsub.f32 %v290, %v794
        %v796 = vand.u32 %v795, 4294901760
        %797 = vmatpush1.msra.mxu0 %v796
        %798 = vmatprep.subr.mxu0 0.0
        %v799 = vand.u32 %v291, 4294901760
        %v800 = vsub.f32 %v291, %v799
        %v801 = vand.u32 %v800, 4294901760
        %802 = vmatpush1.msra.mxu0 %v801
        %803 = vmatprep.subr.mxu0 0.0
        %v804 = vand.u32 %v292, 4294901760
        %v805 = vsub.f32 %v292, %v804
        %v806 = vand.u32 %v805, 4294901760
        %807 = vmatpush1.msra.mxu0 %v806
        %808 = vmatprep.subr.mxu0 0.0
        %809 = vmatpush1.msra.mxu0 0.0
        %810 = vmatprep.subr.mxu0 0.0
        %811 = vmatpush1.msra.mxu0 0.0
        %812 = vmatprep.subr.mxu0 0.0
        %813 = vmatpush1.msra.mxu0 0.0
        %814 = vmatprep.subr.mxu0 0.0
        %815 = vmatpush1.msra.mxu0 0.0
        %816 = vmatprep.subr.mxu0 0.0
        %817 = vmatpush1.msra.mxu0 0.0
        %818 = vmatprep.subr.mxu0 0.0
        %819 = vmatpush1.msra.mxu0 0.0
        %820 = vmatprep.subr.mxu0 0.0
        %821 = vmatpush1.msra.mxu0 0.0
        %822 = vmatprep.subr.mxu0 0.0
        %823 = vmatpush1.msra.mxu0 0.0
        %824 = vmatprep.subr.mxu0 0.0
        %825 = vmatpush1.msra.mxu0 0.0
        %826 = vmatprep.subr.mxu0 0.0
        %827 = vmatpush1.msra.mxu0 0.0
        %828 = vmatprep.subr.mxu0 0.0
        %829 = vmatpush1.msra.mxu0 0.0
        %830 = vmatprep.subr.mxu0 0.0
        %831 = vmatpush1.msra.mxu0 0.0
        %832 = vmatprep.subr.mxu0 0.0
        %833 = vmatpush1.msra.mxu0 0.0
        %834 = vmatprep.subr.mxu0 0.0
        %835 = vmatpush1.msra.mxu0 0.0
        %836 = vmatprep.subr.mxu0 0.0
        %837 = vmatpush1.msra.mxu0 0.0
        %838 = vmatprep.subr.mxu0 0.0
        %839 = vmatpush1.msra.mxu0 0.0
        %840 = vmatprep.mubr.f32.mxu0 0.0
        %v841 = vand.u32 %v276, 4294901760
        %842 = vmatmul.mubr.f32.gmra.mrb[0].mxu0 %v841
        %v843 = vpop.f32.mrb[0].mxu0
        %v844 = vadd.f32 %v725, %v843
        %v845 = vpop.f32.mrb[0].mxu0
        %846 = vdwg.mxu0
        %847 = vmatprep.subr.mxu0 0.0
        %v848 = vand.u32 %v277, 4294901760
        %849 = vmatpush1.msra.mxu0 %v848
        %850 = vmatprep.subr.mxu0 0.0
        %v851 = vand.u32 %v278, 4294901760
        %852 = vmatpush1.msra.mxu0 %v851
        %853 = vmatprep.subr.mxu0 0.0
        %v854 = vand.u32 %v279, 4294901760
        %855 = vmatpush1.msra.mxu0 %v854
        %856 = vmatprep.subr.mxu0 0.0
        %v857 = vand.u32 %v280, 4294901760
        %858 = vmatpush1.msra.mxu0 %v857
        %859 = vmatprep.subr.mxu0 0.0
        %v860 = vand.u32 %v281, 4294901760
        %861 = vmatpush1.msra.mxu0 %v860
        %862 = vmatprep.subr.mxu0 0.0
        %v863 = vand.u32 %v282, 4294901760
        %864 = vmatpush1.msra.mxu0 %v863
        %865 = vmatprep.subr.mxu0 0.0
        %v866 = vand.u32 %v283, 4294901760
        %867 = vmatpush1.msra.mxu0 %v866
        %868 = vmatprep.subr.mxu0 0.0
        %v869 = vand.u32 %v284, 4294901760
        %870 = vmatpush1.msra.mxu0 %v869
        %871 = vmatprep.subr.mxu0 0.0
        %v872 = vand.u32 %v285, 4294901760
        %873 = vmatpush1.msra.mxu0 %v872
        %874 = vmatprep.subr.mxu0 0.0
        %v875 = vand.u32 %v286, 4294901760
        %876 = vmatpush1.msra.mxu0 %v875
        %877 = vmatprep.subr.mxu0 0.0
        %v878 = vand.u32 %v287, 4294901760
        %879 = vmatpush1.msra.mxu0 %v878
        %880 = vmatprep.subr.mxu0 0.0
        %v881 = vand.u32 %v288, 4294901760
        %882 = vmatpush1.msra.mxu0 %v881
        %883 = vmatprep.subr.mxu0 0.0
        %v884 = vand.u32 %v289, 4294901760
        %885 = vmatpush1.msra.mxu0 %v884
        %886 = vmatprep.subr.mxu0 0.0
        %v887 = vand.u32 %v290, 4294901760
        %888 = vmatpush1.msra.mxu0 %v887
        %889 = vmatprep.subr.mxu0 0.0
        %v890 = vand.u32 %v291, 4294901760
        %891 = vmatpush1.msra.mxu0 %v890
        %892 = vmatprep.subr.mxu0 0.0
        %v893 = vand.u32 %v292, 4294901760
        %894 = vmatpush1.msra.mxu0 %v893
        %895 = vmatprep.subr.mxu0 0.0
        %896 = vmatpush1.msra.mxu0 0.0
        %897 = vmatprep.subr.mxu0 0.0
        %898 = vmatpush1.msra.mxu0 0.0
        %899 = vmatprep.subr.mxu0 0.0
        %900 = vmatpush1.msra.mxu0 0.0
        %901 = vmatprep.subr.mxu0 0.0
        %902 = vmatpush1.msra.mxu0 0.0
        %903 = vmatprep.subr.mxu0 0.0
        %904 = vmatpush1.msra.mxu0 0.0
        %905 = vmatprep.subr.mxu0 0.0
        %906 = vmatpush1.msra.mxu0 0.0
        %907 = vmatprep.subr.mxu0 0.0
        %908 = vmatpush1.msra.mxu0 0.0
        %909 = vmatprep.subr.mxu0 0.0
        %910 = vmatpush1.msra.mxu0 0.0
        %911 = vmatprep.subr.mxu0 0.0
        %912 = vmatpush1.msra.mxu0 0.0
        %913 = vmatprep.subr.mxu0 0.0
        %914 = vmatpush1.msra.mxu0 0.0
        %915 = vmatprep.subr.mxu0 0.0
        %916 = vmatpush1.msra.mxu0 0.0
        %917 = vmatprep.subr.mxu0 0.0
        %918 = vmatpush1.msra.mxu0 0.0
        %919 = vmatprep.subr.mxu0 0.0
        %920 = vmatpush1.msra.mxu0 0.0
        %921 = vmatprep.subr.mxu0 0.0
        %922 = vmatpush1.msra.mxu0 0.0
        %923 = vmatprep.subr.mxu0 0.0
        %924 = vmatpush1.msra.mxu0 0.0
        %925 = vmatprep.subr.mxu0 0.0
        %926 = vmatpush1.msra.mxu0 0.0
        %927 = vmatprep.mubr.f32.mxu0 0.0
        %v928 = vand.u32 %v276, 4294901760
        %929 = vmatmul.mubr.f32.gmra.mrb[0].mxu0 %v928
        %v930 = vpop.f32.mrb[0].mxu0
        %v931 = vadd.f32 %v844, %v930
        %v932 = vpop.f32.mrb[0].mxu0
        %933 = vdwg.mxu0
        %v934 = vld [vmem:[%s212] sm:$0xff]
        %v935 = vld [vmem:[#allocation2] sm:$0x1]
        %v936 = vsub.f32 %v935, -70.0
        %v937 = vmul.f32 %v936, 0.025
        %v938 = vsub.f32 %v934, %v937
        %v939 = vmul.f32 %v938, 1.8627676
        %v940 = vadd.f32 %v935, %v939
        %v941 = vsub.f32 %v940, %v931
        %v942 = vsub.f32 %v935, -50.0
        %vm943 = vcmp.gt.f32.partialorder %v942, 0.0
        %v944 = vsel %vm943, 1, 0
        %v945 = vcvt.s32.f32 %v944
        %v946 = vsub.f32 %v941, -70.0
        %v947 = vmul.f32 %v945, %v946
        %v948 = vsub.f32 %v941, %v947
        %s949 = scalar_select %p255, 1, 0
        %v950 = vstv %s949
        %vm951 = vcmp.eq.s32.totalorder %v950, 1
        %v952 = vsel %vm951, -70.0, %v948
        %v953 = vsub.f32 %v952, %v935
        %v954 = vsub.f32 %v952, -70.0
        %v955 = vmul.f32 %v954, 0.025
        %v957 = vlaneseq
        %v958 = vshrl.u32 %v957, 7
        %v959 = vsub.s32 0, %v958
        %v960 = vrot.slane %v955, %v959
        %v962 = vsub.f32 %v934, %v960
        %v963 = vmul.f32 %v953, 0.66712356
        %v965 = vlaneseq
        %v966 = vshrl.u32 %v965, 7
        %v967 = vsub.s32 0, %v966
        %v968 = vrot.slane %v963, %v967
        %v970 = vadd.f32 %v931, %v968
        %s971 = scalar_select %p255, 2.0, 1.8627676
        %v972 = vstv %s971
        %v973 = vmul.f32 %v972, %v962
        %v976 = vunpack.c.l.s4 1966171168
        %v977 = vunpack.c.0.s8 %v976
        %v978 = vlaneseq
        %v979 = vshrl.u32 %v978, 7
        %v980 = vsub.s32 %v977, %v979
        %v981 = vrot.slane %v973, %v980
        %v982 = vcombine.high %v981, %v981
        %v984 = vunpack.c.l.s4 1966171168
        %v985 = vunpack.c.0.s8 %v984
        %v986 = vlaneseq
        %v987 = vshrl.u32 %v986, 7
        %v988 = vsub.s32 %v985, %v987
        %v989 = vrot.slane %v982, %v988
        %v991 = vadd.f32 %v952, %v989
        %v994 = vunpack.c.l.s4 1966171168
        %v995 = vunpack.c.0.s8 %v994
        %v996 = vlaneseq
        %v997 = vshrl.u32 %v996, 7
        %v998 = vsub.s32 %v995, %v997
        %v999 = vrot.slane %v970, %v998
        %v1000 = vcombine.high %v999, %v999
        %v1002 = vunpack.c.l.s4 1966171168
        %v1003 = vunpack.c.0.s8 %v1002
        %v1004 = vlaneseq
        %v1005 = vshrl.u32 %v1004, 7
        %v1006 = vsub.s32 %v1003, %v1005
        %v1007 = vrot.slane %v1000, %v1006
        %v1009 = vsub.f32 %v991, %v1007
        %v1010 = vsub.f32 %v952, -50.0
        %vm1011 = vcmp.gt.f32.partialorder %v1010, 0.0
        %v1012 = vsel %vm1011, 1, 0
        %v1013 = vcvt.s32.f32 %v1012
        %v1014 = vsub.f32 %v1009, -70.0
        %v1015 = vmul.f32 %v1013, %v1014
        %v1016 = vsub.f32 %v1009, %v1015
        %v1017 = vsub.f32 %v1016, %v952
        %v1018 = vsub.f32 %v1016, -70.0
        %v1019 = vmul.f32 %v1018, 0.025
        %v1021 = vlaneseq
        %v1022 = vshrl.u32 %v1021, 7
        %v1023 = vsub.s32 0, %v1022
        %v1024 = vrot.slane %v1019, %v1023
        %v1026 = vsub.f32 %v934, %v1024
        %v1027 = vmul.f32 %v953, 0.62320846
        %v1029 = vlaneseq
        %v1030 = vshrl.u32 %v1029, 7
        %v1031 = vsub.s32 0, %v1030
        %v1032 = vrot.slane %v1027, %v1031
        %v1034 = vadd.f32 %v931, %v1032
        %v1035 = vmul.f32 %v1017, 0.66712356
        %v1037 = vlaneseq
        %v1038 = vshrl.u32 %v1037, 7
        %v1039 = vsub.s32 0, %v1038
        %v1040 = vrot.slane %v1035, %v1039
        %v1042 = vadd.f32 %v1034, %v1040
        %v1043 = vmul.f32 %v1026, 1.8627676
        %v1046 = vunpack.c.l.s4 1966171168
        %v1047 = vunpack.c.0.s8 %v1046
        %v1048 = vlaneseq
        %v1049 = vshrl.u32 %v1048, 7
        %v1050 = vsub.s32 %v1047, %v1049
        %v1051 = vrot.slane %v1043, %v1050
        %v1053 = vunpack.c.l.s4 1966171168
        %v1054 = vunpack.c.0.s8 %v1053
        %v1055 = vlaneseq
        %v1056 = vshrl.u32 %v1055, 7
        %v1057 = vsub.s32 %v1054, %v1056
        %v1058 = vrot.slane %v1051, %v1057
        %v1059 = vcombine.high %v1058, %v1058
        %v1061 = vadd.f32 %v1016, %v1059
        %v1064 = vunpack.c.l.s4 1966171168
        %v1065 = vunpack.c.0.s8 %v1064
        %v1066 = vlaneseq
        %v1067 = vshrl.u32 %v1066, 7
        %v1068 = vsub.s32 %v1065, %v1067
        %v1069 = vrot.slane %v1042, %v1068
        %v1071 = vunpack.c.l.s4 1966171168
        %v1072 = vunpack.c.0.s8 %v1071
        %v1073 = vlaneseq
        %v1074 = vshrl.u32 %v1073, 7
        %v1075 = vsub.s32 %v1072, %v1074
        %v1076 = vrot.slane %v1069, %v1075
        %v1077 = vcombine.high %v1076, %v1076
        %v1079 = vsub.f32 %v1061, %v1077
        %v1080 = vsub.f32 %v1016, -50.0
        %vm1081 = vcmp.gt.f32.partialorder %v1080, 0.0
        %v1082 = vsel %vm1081, 1, 0
        %v1083 = vcvt.s32.f32 %v1082
        %v1084 = vsub.f32 %v1079, -70.0
        %v1085 = vmul.f32 %v1083, %v1084
        %v1086 = vsub.f32 %v1079, %v1085
        %v1087 = vsub.f32 %v1086, %v1016
        %v1088 = vsub.f32 %v1086, -70.0
        %v1089 = vmul.f32 %v1088, 0.025
        %v1091 = vlaneseq
        %v1092 = vshrl.u32 %v1091, 7
        %v1093 = vsub.s32 0, %v1092
        %v1094 = vrot.slane %v1089, %v1093
        %v1096 = vsub.f32 %v934, %v1094
        %v1097 = vmul.f32 %v953, 0.59246516
        %v1099 = vlaneseq
        %v1100 = vshrl.u32 %v1099, 7
        %v1101 = vsub.s32 0, %v1100
        %v1102 = vrot.slane %v1097, %v1101
        %v1104 = vadd.f32 %v931, %v1102
        %v1105 = vmul.f32 %v1017, 0.62320846
        %v1107 = vlaneseq
        %v1108 = vshrl.u32 %v1107, 7
        %v1109 = vsub.s32 0, %v1108
        %v1110 = vrot.slane %v1105, %v1109
        %v1112 = vadd.f32 %v1104, %v1110
        %v1113 = vmul.f32 %v1087, 0.66712356
        %v1115 = vlaneseq
        %v1116 = vshrl.u32 %v1115, 7
        %v1117 = vsub.s32 0, %v1116
        %v1118 = vrot.slane %v1113, %v1117
        %v1120 = vadd.f32 %v1112, %v1118
        %v1121 = vmul.f32 %v1096, 1.8627676
        %v1124 = vunpack.c.l.s4 1966171168
        %v1125 = vunpack.c.0.s8 %v1124
        %v1126 = vlaneseq
        %v1127 = vshrl.u32 %v1126, 7
        %v1128 = vsub.s32 %v1125, %v1127
        %v1129 = vrot.slane %v1121, %v1128
        %v1130 = vcombine.high %v1129, %v1129
        %v1132 = vunpack.c.l.s4 1966171168
        %v1133 = vunpack.c.0.s8 %v1132
        %v1134 = vlaneseq
        %v1135 = vshrl.u32 %v1134, 7
        %v1136 = vsub.s32 %v1133, %v1135
        %v1137 = vrot.slane %v1130, %v1136
        %v1138 = vcombine.high %v1137, %v1137
        %v1140 = vadd.f32 %v1086, %v1138
        %v1143 = vunpack.c.l.s4 1966171168
        %v1144 = vunpack.c.0.s8 %v1143
        %v1145 = vlaneseq
        %v1146 = vshrl.u32 %v1145, 7
        %v1147 = vsub.s32 %v1144, %v1146
        %v1148 = vrot.slane %v1120, %v1147
        %v1149 = vcombine.high %v1148, %v1148
        %v1151 = vunpack.c.l.s4 1966171168
        %v1152 = vunpack.c.0.s8 %v1151
        %v1153 = vlaneseq
        %v1154 = vshrl.u32 %v1153, 7
        %v1155 = vsub.s32 %v1152, %v1154
        %v1156 = vrot.slane %v1149, %v1155
        %v1157 = vcombine.high %v1156, %v1156
        %v1159 = vsub.f32 %v1140, %v1157
        %v1160 = vsub.f32 %v1086, -50.0
        %vm1161 = vcmp.gt.f32.partialorder %v1160, 0.0
        %v1162 = vsel %vm1161, 1, 0
        %v1163 = vcvt.s32.f32 %v1162
        %v1164 = vsub.f32 %v1159, -70.0
        %v1165 = vmul.f32 %v1163, %v1164
        %v1166 = vsub.f32 %v1159, %v1165
        %v1167 = vsub.f32 %v1166, %v1086
        %v1168 = vsub.f32 %v1166, -70.0
        %v1169 = vmul.f32 %v1168, 0.025
        %v1171 = vlaneseq
        %v1172 = vshrl.u32 %v1171, 7
        %v1173 = vsub.s32 0, %v1172
        %v1174 = vrot.slane %v1169, %v1173
        %v1176 = vsub.f32 %v934, %v1174
        %v1177 = vmul.f32 %v953, 0.5690644
        %v1179 = vlaneseq
        %v1180 = vshrl.u32 %v1179, 7
        %v1181 = vsub.s32 0, %v1180
        %v1182 = vrot.slane %v1177, %v1181
        %v1184 = vadd.f32 %v931, %v1182
        %v1185 = vmul.f32 %v1017, 0.59246516
        %v1187 = vlaneseq
        %v1188 = vshrl.u32 %v1187, 7
        %v1189 = vsub.s32 0, %v1188
        %v1190 = vrot.slane %v1185, %v1189
        %v1192 = vadd.f32 %v1184, %v1190
        %v1193 = vmul.f32 %v1087, 0.62320846
        %v1195 = vlaneseq
        %v1196 = vshrl.u32 %v1195, 7
        %v1197 = vsub.s32 0, %v1196
        %v1198 = vrot.slane %v1193, %v1197
        %v1200 = vadd.f32 %v1192, %v1198
        %v1201 = vmul.f32 %v1167, 0.66712356
        %v1203 = vlaneseq
        %v1204 = vshrl.u32 %v1203, 7
        %v1205 = vsub.s32 0, %v1204
        %v1206 = vrot.slane %v1201, %v1205
        %v1208 = vadd.f32 %v1200, %v1206
        %v1209 = vmul.f32 %v1176, 1.8627676
        %v1211 = vcombine.high %v1209, %v1209
        %v1213 = vunpack.c.l.s4 1966171168
        %v1214 = vunpack.c.0.s8 %v1213
        %v1215 = vlaneseq
        %v1216 = vshrl.u32 %v1215, 7
        %v1217 = vsub.s32 %v1214, %v1216
        %v1218 = vrot.slane %v1211, %v1217
        %v1220 = vunpack.c.l.s4 1966171168
        %v1221 = vunpack.c.0.s8 %v1220
        %v1222 = vlaneseq
        %v1223 = vshrl.u32 %v1222, 7
        %v1224 = vsub.s32 %v1221, %v1223
        %v1225 = vrot.slane %v1218, %v1224
        %v1227 = vadd.f32 %v1166, %v1225
        %v1229 = vcombine.high %v1208, %v1208
        %v1231 = vunpack.c.l.s4 1966171168
        %v1232 = vunpack.c.0.s8 %v1231
        %v1233 = vlaneseq
        %v1234 = vshrl.u32 %v1233, 7
        %v1235 = vsub.s32 %v1232, %v1234
        %v1236 = vrot.slane %v1229, %v1235
        %v1238 = vunpack.c.l.s4 1966171168
        %v1239 = vunpack.c.0.s8 %v1238
        %v1240 = vlaneseq
        %v1241 = vshrl.u32 %v1240, 7
        %v1242 = vsub.s32 %v1239, %v1241
        %v1243 = vrot.slane %v1236, %v1242
        %v1245 = vsub.f32 %v1227, %v1243
        %v1246 = vsub.f32 %v1166, -50.0
        %vm1247 = vcmp.gt.f32.partialorder %v1246, 0.0
        %v1248 = vsel %vm1247, 1, 0
        %v1249 = vcvt.s32.f32 %v1248
        %v1250 = vsub.f32 %v1245, -70.0
        %v1251 = vmul.f32 %v1249, %v1250
        %v1252 = vsub.f32 %v1245, %v1251
        %v1253 = vsub.f32 %v1252, %v1166
        %v1254 = vsub.f32 %v1252, -70.0
        %v1255 = vmul.f32 %v1254, 0.025
        %v1257 = vlaneseq
        %v1258 = vshrl.u32 %v1257, 7
        %v1259 = vsub.s32 0, %v1258
        %v1260 = vrot.slane %v1255, %v1259
        %v1262 = vsub.f32 %v934, %v1260
        %v1263 = vmul.f32 %v953, 0.55031365
        %v1265 = vlaneseq
        %v1266 = vshrl.u32 %v1265, 7
        %v1267 = vsub.s32 0, %v1266
        %v1268 = vrot.slane %v1263, %v1267
        %v1270 = vadd.f32 %v931, %v1268
        %v1271 = vmul.f32 %v1017, 0.5690644
        %v1273 = vlaneseq
        %v1274 = vshrl.u32 %v1273, 7
        %v1275 = vsub.s32 0, %v1274
        %v1276 = vrot.slane %v1271, %v1275
        %v1278 = vadd.f32 %v1270, %v1276
        %v1279 = vmul.f32 %v1087, 0.59246516
        %v1281 = vlaneseq
        %v1282 = vshrl.u32 %v1281, 7
        %v1283 = vsub.s32 0, %v1282
        %v1284 = vrot.slane %v1279, %v1283
        %v1286 = vadd.f32 %v1278, %v1284
        %v1287 = vmul.f32 %v1167, 0.62320846
        %v1289 = vlaneseq
        %v1290 = vshrl.u32 %v1289, 7
        %v1291 = vsub.s32 0, %v1290
        %v1292 = vrot.slane %v1287, %v1291
        %v1294 = vadd.f32 %v1286, %v1292
        %v1295 = vmul.f32 %v1253, 0.66712356
        %v1297 = vlaneseq
        %v1298 = vshrl.u32 %v1297, 7
        %v1299 = vsub.s32 0, %v1298
        %v1300 = vrot.slane %v1295, %v1299
        %v1302 = vadd.f32 %v1294, %v1300
        %v1303 = vmul.f32 %v1262, 1.8627676
        %v1305 = vcombine.high %v1303, %v1303
        %v1307 = vunpack.c.l.s4 1966171168
        %v1308 = vunpack.c.0.s8 %v1307
        %v1309 = vlaneseq
        %v1310 = vshrl.u32 %v1309, 7
        %v1311 = vsub.s32 %v1308, %v1310
        %v1312 = vrot.slane %v1305, %v1311
        %v1313 = vcombine.high %v1312, %v1312
        %v1315 = vunpack.c.l.s4 1966171168
        %v1316 = vunpack.c.0.s8 %v1315
        %v1317 = vlaneseq
        %v1318 = vshrl.u32 %v1317, 7
        %v1319 = vsub.s32 %v1316, %v1318
        %v1320 = vrot.slane %v1313, %v1319
        %v1322 = vadd.f32 %v1252, %v1320
        %v1324 = vcombine.high %v1302, %v1302
        %v1326 = vunpack.c.l.s4 1966171168
        %v1327 = vunpack.c.0.s8 %v1326
        %v1328 = vlaneseq
        %v1329 = vshrl.u32 %v1328, 7
        %v1330 = vsub.s32 %v1327, %v1329
        %v1331 = vrot.slane %v1324, %v1330
        %v1332 = vcombine.high %v1331, %v1331
        %v1334 = vunpack.c.l.s4 1966171168
        %v1335 = vunpack.c.0.s8 %v1334
        %v1336 = vlaneseq
        %v1337 = vshrl.u32 %v1336, 7
        %v1338 = vsub.s32 %v1335, %v1337
        %v1339 = vrot.slane %v1332, %v1338
        %v1341 = vsub.f32 %v1322, %v1339
        %v1342 = vsub.f32 %v1252, -50.0
        %vm1343 = vcmp.gt.f32.partialorder %v1342, 0.0
        %v1344 = vsel %vm1343, 1, 0
        %v1345 = vcvt.s32.f32 %v1344
        %v1346 = vsub.f32 %v1341, -70.0
        %v1347 = vmul.f32 %v1345, %v1346
        %v1348 = vsub.f32 %v1341, %v1347
        %v1349 = vsub.f32 %v1348, %v1252
        %v1350 = vsub.f32 %v1348, -70.0
        %v1351 = vmul.f32 %v1350, 0.025
        %v1353 = vlaneseq
        %v1354 = vshrl.u32 %v1353, 7
        %v1355 = vsub.s32 0, %v1354
        %v1356 = vrot.slane %v1351, %v1355
        %v1358 = vsub.f32 %v934, %v1356
        %v1359 = vmul.f32 %v953, 0.53475523
        %v1361 = vlaneseq
        %v1362 = vshrl.u32 %v1361, 7
        %v1363 = vsub.s32 0, %v1362
        %v1364 = vrot.slane %v1359, %v1363
        %v1366 = vadd.f32 %v931, %v1364
        %v1367 = vmul.f32 %v1017, 0.55031365
        %v1369 = vlaneseq
        %v1370 = vshrl.u32 %v1369, 7
        %v1371 = vsub.s32 0, %v1370
        %v1372 = vrot.slane %v1367, %v1371
        %v1374 = vadd.f32 %v1366, %v1372
        %v1375 = vmul.f32 %v1087, 0.5690644
        %v1377 = vlaneseq
        %v1378 = vshrl.u32 %v1377, 7
        %v1379 = vsub.s32 0, %v1378
        %v1380 = vrot.slane %v1375, %v1379
        %v1382 = vadd.f32 %v1374, %v1380
        %v1383 = vmul.f32 %v1167, 0.59246516
        %v1385 = vlaneseq
        %v1386 = vshrl.u32 %v1385, 7
        %v1387 = vsub.s32 0, %v1386
        %v1388 = vrot.slane %v1383, %v1387
        %v1390 = vadd.f32 %v1382, %v1388
        %v1391 = vmul.f32 %v1253, 0.62320846
        %v1393 = vlaneseq
        %v1394 = vshrl.u32 %v1393, 7
        %v1395 = vsub.s32 0, %v1394
        %v1396 = vrot.slane %v1391, %v1395
        %v1398 = vadd.f32 %v1390, %v1396
        %v1399 = vmul.f32 %v1349, 0.66712356
        %v1401 = vlaneseq
        %v1402 = vshrl.u32 %v1401, 7
        %v1403 = vsub.s32 0, %v1402
        %v1404 = vrot.slane %v1399, %v1403
        %v1406 = vadd.f32 %v1398, %v1404
        %v1407 = vmul.f32 %v1358, 1.8627676
        %v1409 = vcombine.high %v1407, %v1407
        %v1411 = vunpack.c.l.s4 1966171168
        %v1412 = vunpack.c.0.s8 %v1411
        %v1413 = vlaneseq
        %v1414 = vshrl.u32 %v1413, 7
        %v1415 = vsub.s32 %v1412, %v1414
        %v1416 = vrot.slane %v1409, %v1415
        %v1418 = vunpack.c.l.s4 1966171168
        %v1419 = vunpack.c.0.s8 %v1418
        %v1420 = vlaneseq
        %v1421 = vshrl.u32 %v1420, 7
        %v1422 = vsub.s32 %v1419, %v1421
        %v1423 = vrot.slane %v1416, %v1422
        %v1424 = vcombine.high %v1423, %v1423
        %v1426 = vadd.f32 %v1348, %v1424
        %v1428 = vcombine.high %v1406, %v1406
        %v1430 = vunpack.c.l.s4 1966171168
        %v1431 = vunpack.c.0.s8 %v1430
        %v1432 = vlaneseq
        %v1433 = vshrl.u32 %v1432, 7
        %v1434 = vsub.s32 %v1431, %v1433
        %v1435 = vrot.slane %v1428, %v1434
        %v1437 = vunpack.c.l.s4 1966171168
        %v1438 = vunpack.c.0.s8 %v1437
        %v1439 = vlaneseq
        %v1440 = vshrl.u32 %v1439, 7
        %v1441 = vsub.s32 %v1438, %v1440
        %v1442 = vrot.slane %v1435, %v1441
        %v1443 = vcombine.high %v1442, %v1442
        %v1445 = vsub.f32 %v1426, %v1443
        %v1446 = vsub.f32 %v1348, -50.0
        %vm1447 = vcmp.gt.f32.partialorder %v1446, 0.0
        %v1448 = vsel %vm1447, 1, 0
        %v1449 = vcvt.s32.f32 %v1448
        %v1450 = vsub.f32 %v1445, -70.0
        %v1451 = vmul.f32 %v1449, %v1450
        %v1452 = vsub.f32 %v1445, %v1451
        %v1453 = vsub.f32 %v1452, %v1348
        %v1454 = vsub.f32 %v1452, -70.0
        %v1455 = vmul.f32 %v1454, 0.025
        %v1457 = vlaneseq
        %v1458 = vshrl.u32 %v1457, 7
        %v1459 = vsub.s32 0, %v1458
        %v1460 = vrot.slane %v1455, %v1459
        %v1462 = vsub.f32 %v934, %v1460
        %v1463 = vmul.f32 %v953, 0.5215145
        %v1465 = vlaneseq
        %v1466 = vshrl.u32 %v1465, 7
        %v1467 = vsub.s32 0, %v1466
        %v1468 = vrot.slane %v1463, %v1467
        %v1470 = vadd.f32 %v931, %v1468
        %v1471 = vmul.f32 %v1017, 0.53475523
        %v1473 = vlaneseq
        %v1474 = vshrl.u32 %v1473, 7
        %v1475 = vsub.s32 0, %v1474
        %v1476 = vrot.slane %v1471, %v1475
        %v1478 = vadd.f32 %v1470, %v1476
        %v1479 = vmul.f32 %v1087, 0.55031365
        %v1481 = vlaneseq
        %v1482 = vshrl.u32 %v1481, 7
        %v1483 = vsub.s32 0, %v1482
        %v1484 = vrot.slane %v1479, %v1483
        %v1486 = vadd.f32 %v1478, %v1484
        %v1487 = vmul.f32 %v1167, 0.5690644
        %v1489 = vlaneseq
        %v1490 = vshrl.u32 %v1489, 7
        %v1491 = vsub.s32 0, %v1490
        %v1492 = vrot.slane %v1487, %v1491
        %v1494 = vadd.f32 %v1486, %v1492
        %v1495 = vmul.f32 %v1253, 0.59246516
        %v1497 = vlaneseq
        %v1498 = vshrl.u32 %v1497, 7
        %v1499 = vsub.s32 0, %v1498
        %v1500 = vrot.slane %v1495, %v1499
        %v1502 = vadd.f32 %v1494, %v1500
        %v1503 = vmul.f32 %v1349, 0.62320846
        %v1505 = vlaneseq
        %v1506 = vshrl.u32 %v1505, 7
        %v1507 = vsub.s32 0, %v1506
        %v1508 = vrot.slane %v1503, %v1507
        %v1510 = vadd.f32 %v1502, %v1508
        %v1511 = vmul.f32 %v1453, 0.66712356
        %v1513 = vlaneseq
        %v1514 = vshrl.u32 %v1513, 7
        %v1515 = vsub.s32 0, %v1514
        %v1516 = vrot.slane %v1511, %v1515
        %v1518 = vadd.f32 %v1510, %v1516
        %v1519 = vmul.f32 %v1462, 1.8627676
        %v1521 = vcombine.high %v1519, %v1519
        %v1523 = vunpack.c.l.s4 1966171168
        %v1524 = vunpack.c.0.s8 %v1523
        %v1525 = vlaneseq
        %v1526 = vshrl.u32 %v1525, 7
        %v1527 = vsub.s32 %v1524, %v1526
        %v1528 = vrot.slane %v1521, %v1527
        %v1529 = vcombine.high %v1528, %v1528
        %v1531 = vunpack.c.l.s4 1966171168
        %v1532 = vunpack.c.0.s8 %v1531
        %v1533 = vlaneseq
        %v1534 = vshrl.u32 %v1533, 7
        %v1535 = vsub.s32 %v1532, %v1534
        %v1536 = vrot.slane %v1529, %v1535
        %v1537 = vcombine.high %v1536, %v1536
        %v1539 = vadd.f32 %v1452, %v1537
        %v1541 = vcombine.high %v1518, %v1518
        %v1543 = vunpack.c.l.s4 1966171168
        %v1544 = vunpack.c.0.s8 %v1543
        %v1545 = vlaneseq
        %v1546 = vshrl.u32 %v1545, 7
        %v1547 = vsub.s32 %v1544, %v1546
        %v1548 = vrot.slane %v1541, %v1547
        %v1549 = vcombine.high %v1548, %v1548
        %v1551 = vunpack.c.l.s4 1966171168
        %v1552 = vunpack.c.0.s8 %v1551
        %v1553 = vlaneseq
        %v1554 = vshrl.u32 %v1553, 7
        %v1555 = vsub.s32 %v1552, %v1554
        %v1556 = vrot.slane %v1549, %v1555
        %v1557 = vcombine.high %v1556, %v1556
        %v1559 = vsub.f32 %v1539, %v1557
        %v1560 = vsub.f32 %v1452, -50.0
        %vm1561 = vcmp.gt.f32.partialorder %v1560, 0.0
        %v1562 = vsel %vm1561, 1, 0
        %v1563 = vcvt.s32.f32 %v1562
        %v1564 = vsub.f32 %v1559, -70.0
        %v1565 = vmul.f32 %v1563, %v1564
        %v1566 = vsub.f32 %v1559, %v1565
        %v1567 = vsub.f32 %v1566, %v1452
        %v1569 = vlaneseq
        %v1570 = vshrl.u32 %v1569, 7
        %v1571 = vsub.s32 0, %v1570
        %v1572 = vrot.slane %v1013, %v1571
        %v1575 = vlaneseq
        %v1576 = vshrl.u32 %v1575, 7
        %v1577 = vsub.s32 0, %v1576
        %v1578 = vrot.slane %v1083, %v1577
        %v1581 = vlaneseq
        %v1582 = vshrl.u32 %v1581, 7
        %v1583 = vsub.s32 0, %v1582
        %v1584 = vrot.slane %v1163, %v1583
        %v1587 = vlaneseq
        %v1588 = vshrl.u32 %v1587, 7
        %v1589 = vsub.s32 0, %v1588
        %v1590 = vrot.slane %v1249, %v1589
        %v1593 = vlaneseq
        %v1594 = vshrl.u32 %v1593, 7
        %v1595 = vsub.s32 0, %v1594
        %v1596 = vrot.slane %v1345, %v1595
        %v1599 = vlaneseq
        %v1600 = vshrl.u32 %v1599, 7
        %v1601 = vsub.s32 0, %v1600
        %v1602 = vrot.slane %v1449, %v1601
        %v1605 = vlaneseq
        %v1606 = vshrl.u32 %v1605, 7
        %v1607 = vsub.s32 0, %v1606
        %v1608 = vrot.slane %v1563, %v1607
        %vm1610 = vcmask 1040384
        %v1611 = vsel %vm1610, %v945, %v1572
        %vm1612 = vcmask 1041408
        %v1613 = vsel %vm1612, %v1611, %v1578
        %vm1614 = vcmask 1042432
        %v1615 = vsel %vm1614, %v1613, %v1584
        %vm1616 = vcmask 1043456
        %v1617 = vsel %vm1616, %v1615, %v1590
        %vm1618 = vcmask 1044480
        %v1619 = vsel %vm1618, %v1617, %v1596
        %vm1620 = vcmask 1045504
        %v1621 = vsel %vm1620, %v1619, %v1602
        %vm1622 = vcmask 1046528
        %v1623 = vsel %vm1622, %v1621, %v1608
        %1624 = vst [vmem:[%s246] sm:$0xff] %v1623
        %v1626 = vlaneseq
        %v1627 = vshrl.u32 %v1626, 7
        %v1628 = vsub.s32 0, %v1627
        %v1629 = vrot.slane %v1016, %v1628
        %v1632 = vlaneseq
        %v1633 = vshrl.u32 %v1632, 7
        %v1634 = vsub.s32 0, %v1633
        %v1635 = vrot.slane %v1086, %v1634
        %v1638 = vlaneseq
        %v1639 = vshrl.u32 %v1638, 7
        %v1640 = vsub.s32 0, %v1639
        %v1641 = vrot.slane %v1166, %v1640
        %v1644 = vlaneseq
        %v1645 = vshrl.u32 %v1644, 7
        %v1646 = vsub.s32 0, %v1645
        %v1647 = vrot.slane %v1252, %v1646
        %v1650 = vlaneseq
        %v1651 = vshrl.u32 %v1650, 7
        %v1652 = vsub.s32 0, %v1651
        %v1653 = vrot.slane %v1348, %v1652
        %v1656 = vlaneseq
        %v1657 = vshrl.u32 %v1656, 7
        %v1658 = vsub.s32 0, %v1657
        %v1659 = vrot.slane %v1452, %v1658
        %v1662 = vlaneseq
        %v1663 = vshrl.u32 %v1662, 7
        %v1664 = vsub.s32 0, %v1663
        %v1665 = vrot.slane %v1566, %v1664
        %v1667 = vsel %vm1610, %v952, %v1629
        %v1668 = vsel %vm1612, %v1667, %v1635
        %v1669 = vsel %vm1614, %v1668, %v1641
        %v1670 = vsel %vm1616, %v1669, %v1647
        %v1671 = vsel %vm1618, %v1670, %v1653
        %v1672 = vsel %vm1620, %v1671, %v1659
        %v1673 = vsel %vm1622, %v1672, %v1665
        %1674 = vst [vmem:[%s253] sm:$0xff] %v1673
        %v1676 = vlaneseq
        %v1677 = vshrl.u32 %v1676, 7
        %v1678 = vsub.s32 0, %v1677
        %v1679 = vrot.slane %v1017, %v1678
        %v1682 = vlaneseq
        %v1683 = vshrl.u32 %v1682, 7
        %v1684 = vsub.s32 0, %v1683
        %v1685 = vrot.slane %v1087, %v1684
        %v1688 = vlaneseq
        %v1689 = vshrl.u32 %v1688, 7
        %v1690 = vsub.s32 0, %v1689
        %v1691 = vrot.slane %v1167, %v1690
        %v1694 = vlaneseq
        %v1695 = vshrl.u32 %v1694, 7
        %v1696 = vsub.s32 0, %v1695
        %v1697 = vrot.slane %v1253, %v1696
        %v1700 = vlaneseq
        %v1701 = vshrl.u32 %v1700, 7
        %v1702 = vsub.s32 0, %v1701
        %v1703 = vrot.slane %v1349, %v1702
        %v1706 = vlaneseq
        %v1707 = vshrl.u32 %v1706, 7
        %v1708 = vsub.s32 0, %v1707
        %v1709 = vrot.slane %v1453, %v1708
        %v1712 = vlaneseq
        %v1713 = vshrl.u32 %v1712, 7
        %v1714 = vsub.s32 0, %v1713
        %v1715 = vrot.slane %v1567, %v1714
        %v1717 = vsel %vm1610, %v953, %v1679
        %v1718 = vsel %vm1612, %v1717, %v1685
        %v1719 = vsel %vm1614, %v1718, %v1691
        %v1720 = vsel %vm1616, %v1719, %v1697
        %v1721 = vsel %vm1618, %v1720, %v1703
        %v1722 = vsel %vm1620, %v1721, %v1709
        %v1723 = vsel %vm1622, %v1722, %v1715
        %s1724 = scalar_lea.vmem [#allocation3], %s254
        %1725 = vst [vmem:[%s1724] sm:$0xff] %v1723
        %1726 = vst [vmem:[#allocation2] sm:$0x1] %v1566
        %s1727 = sand.u32 %s103, 1
        %s1728 = scalar_lea.sflag [#allocation6], %s1727
        %s1729 = sand.u32 %s103, 1
        %s1730 = smul.addr %s1729, 8
        %s1731 = scalar_lea.vmem [#allocation9], %s1730
        %s1732 = sand.u32 %s131, 1
        %s1733 = scalar_lea.sflag [#allocation11], %s1732
        %s1734 = sand.u32 %s131, 1
        %s1735 = smul.addr %s1734, 8
        %s1736 = scalar_lea.vmem [#allocation10], %s1735
        // Predicated region
        $region41: #{tpu_custom_call.1} parent=27 // pred_check
          %p1737 = pneg %p113
        $region42: #{tpu_custom_call.1} parent=27 // pred_check_branch
          %1739 = sbr.rel (%p1737) target = $region44
        $region43: #{tpu_custom_call.1} parent=27 // pred_region
          %s1741 = ssub.s32 128, 128
          %1742 = vsyncadd %s1728, %s1741
          %s1743 = smul.addr %s32, 2
          %s1744 = sadd.s32 %s31, %s1743
          %s1745 = smul.addr %s1744, 128
          %s1746 = scalar_lea.hbm %s2, %s1745
          %s1748 = sshll.u32 %s1731, 4
          %s1749 = int_to_ptr.vmem [resolvable:$true] %s1748
          %1751 = dma.vmem_to_hbm [thread:$0]  %s1749, 128, %s1746, %s1728
        $region44: #{tpu_custom_call.1} parent=27 // pred_fallthru
          _
        // Predicated region
        $region45: #{tpu_custom_call.1} parent=27 // pred_check
          %p1752 = pneg %p141
        $region46: #{tpu_custom_call.1} parent=27 // pred_check_branch
          %1754 = sbr.rel (%p1752) target = $region48
        $region47: #{tpu_custom_call.1} parent=27 // pred_region
          %s1756 = ssub.s32 128, 128
          %1757 = vsyncadd %s1733, %s1756
          %s1758 = smul.addr %s32, 2
          %s1759 = sadd.s32 %s31, %s1758
          %s1760 = smul.addr %s1759, 128
          %s1761 = scalar_lea.hbm %s3, %s1760
          %s1763 = sshll.u32 %s1736, 4
          %s1764 = int_to_ptr.vmem [resolvable:$true] %s1763
          %1766 = dma.vmem_to_hbm [thread:$0]  %s1764, 128, %s1761, %s1733
        $region48: #{tpu_custom_call.1} parent=27 // pred_fallthru
          _
      $region28: #{tpu_custom_call.1} parent=5 // pred_fallthru
        _
      %p1767 = scmp.le.s32.totalorder 2, %s22
      // Predicated region
      $region49: #{tpu_custom_call.1} parent=5 // pred_check
        %p1768 = pneg %p1767
      $region50: #{tpu_custom_call.1} parent=5 // pred_check_branch
        %1770 = sbr.rel (%p1768) target = $region52
      $region51: #{tpu_custom_call.1} parent=5 // pred_region
        %s1771 = ssub.s32 %s22, 2
        // Predicated region
        $region53: #{tpu_custom_call.1} parent=51 // pred_check
          %p1772 = pneg %p119
        $region54: #{tpu_custom_call.1} parent=51 // pred_check_branch
          %1774 = sbr.rel (%p1772) target = $region56
        $region55: #{tpu_custom_call.1} parent=51 // pred_region
          %s1775 = sand.u32 %s104, 1
          %s1776 = scalar_lea.sflag [#allocation6], %s1775
          %s1777 = sand.u32 %s104, 1
          %s1778 = smul.addr %s1777, 8
          %s1779 = scalar_lea.vmem [#allocation9], %s1778
          %1780 = dma.done %s1776, 128
        $region56: #{tpu_custom_call.1} parent=51 // pred_fallthru
          _
        // Predicated region
        $region57: #{tpu_custom_call.1} parent=51 // pred_check
          %p1781 = pneg %p147
        $region58: #{tpu_custom_call.1} parent=51 // pred_check_branch
          %1783 = sbr.rel (%p1781) target = $region60
        $region59: #{tpu_custom_call.1} parent=51 // pred_region
          %s1784 = sand.u32 %s132, 1
          %s1785 = scalar_lea.sflag [#allocation11], %s1784
          %s1786 = sand.u32 %s132, 1
          %s1787 = smul.addr %s1786, 8
          %s1788 = scalar_lea.vmem [#allocation10], %s1787
          %1789 = dma.done %s1785, 128
        $region60: #{tpu_custom_call.1} parent=51 // pred_fallthru
          _
      $region52: #{tpu_custom_call.1} parent=5 // pred_fallthru
        _
    $region6: #{tpu_custom_call.1} parent=1 // loop_footer
      %s26 = sadd.s32 1, %s22
    $region7: #{tpu_custom_call.1} parent=1 // loop_footer_branch
      %21 = sbr.rel target = $region3
    $region8: #{tpu_custom_call.1} parent=1 // loop_exit
      _
    %1790 = vsyncpa [#allocation5], 1
    %s1791 = scalar_lea.sflag [#allocation5], 1
    %1792 = vsyncpa %s1791, 1
    %1793 = vsyncpa [#allocation8], 1
    %s1794 = scalar_lea.sflag [#allocation8], 1
    %1795 = vsyncpa %s1794, 1
    %1796 = vsyncpa [#allocation6], 1
    %s1797 = scalar_lea.sflag [#allocation6], 1
    %1798 = vsyncpa %s1797, 1
    %1799 = vsyncpa [#allocation11], 1
    %s1800 = scalar_lea.sflag [#allocation11], 1
    %1801 = vsyncpa %s1800, 1

</llo_original>
